<compile_context>
chip_gen: v5e
topology: v5e:2x2
jax: 0.10.0
libtpu: 0.0.40
codegen_flags: <defaults>
</compile_context>

<pallas_src>
import jax
import jax.numpy as jnp
from jax.experimental import pallas as pl
from jax.experimental.pallas import tpu as pltpu

LATENT_DIM = 128   # latent_dim
HIDDEN_DIM = 256   # hidden_dim (smaller than the 512 default, same structure)
NUM_LAYERS = 3     # num_layers (smaller than the 6 default, same structure)
EPS = 1e-5         # nn.LayerNorm default eps


# ---------------------------------------------------------------------------
# LayerNorm helpers
# ---------------------------------------------------------------------------
def _layernorm_ref(x, gamma, beta):
    """Two-pass textbook LayerNorm (used only by the pure-JAX reference)."""
    mean = jnp.mean(x, axis=-1, keepdims=True)
    var = jnp.mean(jnp.square(x - mean), axis=-1, keepdims=True)
    return (x - mean) * jax.lax.rsqrt(var + EPS) * gamma + beta


def _layernorm_1pass(x, gamma, beta):
    """Single-pass LayerNorm: the two reductions are independent (shorter XLU
    dependency chain).  Variance is clamped at 0 before rsqrt to guard against
    catastrophic cancellation in E[x^2] - mean^2."""
    inv_n = 1.0 / x.shape[-1]
    s1 = jnp.sum(x, axis=-1, keepdims=True)
    s2 = jnp.sum(x * x, axis=-1, keepdims=True)
    mean = s1 * inv_n
    var = jnp.maximum(s2 * inv_n - mean * mean, 0.0)
    return (x - mean) * jax.lax.rsqrt(var + EPS) * gamma + beta


# ---------------------------------------------------------------------------
# Kernel
# ---------------------------------------------------------------------------
# Packed parameter layouts (rows, built once in prepare_params):
#   ph (11, H) f32 : 0 = w1 (time-embed Linear(1,H) weight), 1 = b1,
#                    2..4 = ba[l], 5..7 = g1[l], 8..10 = be1[l]
#   pb (11, L) f32 : 0 = b2, 1..3 = bb[l], 4..6 = g2[l], 7..9 = be2[l],
#                    10 = b_attn (= bv @ Wo + bo)
def diffusion_kernel(t_ref, z_ref,
                     w2_ref, wa_ref, wb_ref, wattn_ref,
                     ph_ref, pb_ref,
                     out_ref):
    f32 = jnp.float32
    bf16 = jnp.bfloat16

    w1 = ph_ref[0:1, :]                                              # (1, H)
    b1 = ph_ref[1:2, :]                                              # (1, H)
    b2 = pb_ref[0:1, :]                                              # (1, L)
    battn = pb_ref[10:11, :]                                         # (1, L)

    # ---- time embedding: Linear(1, H) -> ReLU -> Linear(H, L) --------------
    # Linear with in_features=1 is a VPU outer product (no MXU needed).
    t = t_ref[...]                                                   # (TB, 1) f32
    h = jnp.maximum(t * w1 + b1, 0.0)                                # (TB, H) f32
    t_embed = (jnp.dot(h.astype(bf16), w2_ref[...],
                       preferred_element_type=f32) + b2)             # (TB, L) f32

    # ---- residual MLP blocks: z = layer(z + t_embed) + z -------------------
    z = z_ref[...]                                                   # (TB, L) f32
    for l in range(NUM_LAYERS):  # static unroll; per-layer params indexed statically
        ba = ph_ref[2 + l:3 + l, :]
        g1 = ph_ref[5 + l:6 + l, :]
        be1 = ph_ref[8 + l:9 + l, :]
        bb = pb_ref[1 + l:2 + l, :]
        g2 = pb_ref[4 + l:5 + l, :]
        be2 = pb_ref[7 + l:8 + l, :]

        hin = (z + t_embed).astype(bf16)
        a = jnp.dot(hin, wa_ref[l], preferred_element_type=f32) + ba  # (TB, H)
        a = _layernorm_1pass(a, g1, be1)
        a = jnp.maximum(a, 0.0).astype(bf16)
        b = jnp.dot(a, wb_ref[l], preferred_element_type=f32) + bb    # (TB, L)
        b = _layernorm_1pass(b, g2, be2)
        z = b + z

    # ---- FeatureWiseAttention with seq_len == 1 -----------------------------
    # softmax over a length-1 key axis is exactly 1.0, so attention reduces to
    # out_proj(v_proj(z)).  Wv@Wo / bv@Wo+bo are pre-folded (kept in f32 to
    # avoid double rounding), leaving a single f32 matmul here.
    out_ref[...] = (jnp.dot(z, wattn_ref[...], preferred_element_type=f32)
                    + battn)


# ---------------------------------------------------------------------------
# One-time parameter preparation (hoisted out of the per-step wrapper)
# ---------------------------------------------------------------------------
def prepare_params(p):
    bf16 = jnp.bfloat16
    f32 = jnp.float32

    # Fold the seq_len==1 attention into a single matmul (exact algebraically).
    w_attn = (p["wv"] @ p["wo"]).astype(f32)                          # (L, L) f32
    b_attn = (p["bv"] @ p["wo"] + p["bo"]).astype(f32)                # (1, L) f32

    ph = jnp.concatenate(
        [p["w1"], p["b1"],
         p["ba"][:, 0, :], p["g1"][:, 0, :], p["be1"][:, 0, :]], axis=0
    ).astype(f32)                                                     # (11, H)
    pb = jnp.concatenate(
        [p["b2"], p["bb"][:, 0, :], p["g2"][:, 0, :], p["be2"][:, 0, :],
         b_attn], axis=0
    ).astype(f32)                                                     # (11, L)

    return {
        "w2": p["w2"].astype(bf16),       # (H, L)
        "wa": p["wa"].astype(bf16),       # (NL, L, H)
        "wb": p["wb"].astype(bf16),       # (NL, H, L)
        "wattn": w_attn,                  # (L, L) f32
        "ph": ph,
        "pb": pb,
    }


# ---------------------------------------------------------------------------
# Batch tile selection
# ---------------------------------------------------------------------------
def _max_tile():
    # MXU-native M: 128 on v5e (4x128x128 MXU), 256 on v6e/v7x (2x256x256).
    try:
        kind = jax.devices()[0].device_kind.lower()
        if "v5" in kind:
            return 128
    except Exception:
        pass
    return 256


def _pick_batch_tile(B):
    """Pick (tile, padded_batch): tile = min(MXU-native M, padded batch), and
    when the batch is large enough split it into >=2 grid steps so both
    TensorCores (megacore / v7x) get work.  Never pads a small batch up to the
    big tile."""
    max_tile = _max_tile()
    b8 = ((B + 7) // 8) * 8
    if b8 <= 8:
        tb = 8
    elif b8 <= 2 * max_tile:
        tb = ((b8 // 2 + 7) // 8) * 8     # ~half the batch per step, >=2 steps
    else:
        tb = max_tile
    b_pad = ((b8 + tb - 1) // tb) * tb
    return tb, b_pad


# ---------------------------------------------------------------------------
# Wrapper (per-step forward; expects params already run through prepare_params)
# ---------------------------------------------------------------------------
def diffusion_forward(z, t, prepped):
    B, L = z.shape
    H = HIDDEN_DIM

    t_col = t.astype(jnp.float32).reshape(B, 1)       # t.float().unsqueeze(-1)

    tb, b_pad = _pick_batch_tile(B)
    if b_pad != B:
        z_in = jnp.pad(z, ((0, b_pad - B), (0, 0)))
        t_in = jnp.pad(t_col, ((0, b_pad - B), (0, 0)))
    else:
        z_in, t_in = z, t_col

    consts = (prepped["w2"], prepped["wa"], prepped["wb"], prepped["wattn"],
              prepped["ph"], prepped["pb"])

    def const_spec(a):  # grid-invariant, fully VMEM-resident parameter
        n = a.ndim
        return pl.BlockSpec(a.shape, lambda i, _n=n: (0,) * _n)

    in_specs = [pl.BlockSpec((tb, 1), lambda i: (i, 0)),    # t  (batch-tiled)
                pl.BlockSpec((tb, L), lambda i: (i, 0))]    # z  (batch-tiled)
    in_specs += [const_spec(a) for a in consts]

    # Advisory cost estimate for the XLA scheduler.
    flops = int(b_pad * (2 * H * L
                         + NUM_LAYERS * (2 * L * H + 2 * H * L)
                         + 2 * L * L))
    bytes_accessed = int(t_in.size * 4 + z_in.size * 4 + b_pad * L * 4
                         + sum(a.size * a.dtype.itemsize for a in consts))
    transcendentals = int(b_pad * NUM_LAYERS * 2)           # rsqrt per LayerNorm row

    out = pl.pallas_call(
        diffusion_kernel,
        out_shape=jax.ShapeDtypeStruct((b_pad, L), jnp.float32),
        grid_spec=pl.GridSpec(
            grid=(b_pad // tb,),
            in_specs=in_specs,
            out_specs=pl.BlockSpec((tb, L), lambda i: (i, 0)),
        ),
        compiler_params=pltpu.CompilerParams(
            dimension_semantics=("parallel",)),
        cost_estimate=pl.CostEstimate(flops=flops,
                                      transcendentals=transcendentals,
                                      bytes_accessed=bytes_accessed),
    )(t_in, z_in, *consts)
    return out[:B]


# ---------------------------------------------------------------------------
# Params + pure-JAX reference (f32, unfused attention, two-pass LayerNorm)
# ---------------------------------------------------------------------------
def init_params(key):
    ks = jax.random.split(key, 12)

    def w(k, shape, fan_in):
        return jax.random.normal(k, shape, jnp.float32) / jnp.sqrt(float(fan_in))

    p = {}
    # time_embedding: Linear(1, H) -> ReLU -> Linear(H, L)
    p["w1"] = w(ks[0], (1, HIDDEN_DIM), 1.0)
    p["b1"] = 0.1 * w(ks[1], (1, HIDDEN_DIM), 1.0)
    p["w2"] = w(ks[2], (HIDDEN_DIM, LATENT_DIM), HIDDEN_DIM)
    p["b2"] = w(ks[3], (1, LATENT_DIM), HIDDEN_DIM)
    # per-layer: Linear(L,H), LayerNorm(H), ReLU, Linear(H,L), LayerNorm(L)
    p["wa"] = w(ks[4], (NUM_LAYERS, LATENT_DIM, HIDDEN_DIM), LATENT_DIM)
    p["ba"] = w(ks[5], (NUM_LAYERS, 1, HIDDEN_DIM), LATENT_DIM)
    p["g1"] = jnp.ones((NUM_LAYERS, 1, HIDDEN_DIM), jnp.float32)
    p["be1"] = jnp.zeros((NUM_LAYERS, 1, HIDDEN_DIM), jnp.float32)
    p["wb"] = w(ks[6], (NUM_LAYERS, HIDDEN_DIM, LATENT_DIM), HIDDEN_DIM)
    p["bb"] = w(ks[7], (NUM_LAYERS, 1, LATENT_DIM), HIDDEN_DIM)
    p["g2"] = jnp.ones((NUM_LAYERS, 1, LATENT_DIM), jnp.float32)
    p["be2"] = jnp.zeros((NUM_LAYERS, 1, LATENT_DIM), jnp.float32)
    # MultiheadAttention: only V and out_proj matter when seq_len == 1
    p["wv"] = w(ks[8], (LATENT_DIM, LATENT_DIM), LATENT_DIM)
    p["bv"] = w(ks[9], (1, LATENT_DIM), LATENT_DIM)
    p["wo"] = w(ks[10], (LATENT_DIM, LATENT_DIM), LATENT_DIM)
    p["bo"] = w(ks[11], (1, LATENT_DIM), LATENT_DIM)
    return p


def reference(z, t, p):
    """Pure-JAX f32 reference mirroring the PyTorch forward (attention NOT
    pre-folded, LayerNorm two-pass) so it also validates the kernel's
    algebraic fusion."""
    t_col = t.astype(jnp.float32).reshape(-1, 1)
    h = jnp.maximum(t_col @ p["w1"] + p["b1"], 0.0)
    t_embed = h @ p["w2"] + p["b2"]
    for l in range(NUM_LAYERS):
        a = (z + t_embed) @ p["wa"][l] + p["ba"][l]
        a = _layernorm_ref(a, p["g1"][l], p["be1"][l])
        a = jnp.maximum(a, 0.0)
        b = a @ p["wb"][l] + p["bb"][l]
        b = _layernorm_ref(b, p["g2"][l], p["be2"][l])
        z = b + z
    v = z @ p["wv"] + p["bv"]
    return v @ p["wo"] + p["bo"]


if __name__ == "__main__":
    key = jax.random.PRNGKey(0)
    kz, kt, kp, kz2, kt2 = jax.random.split(key, 5)

    params = init_params(kp)
    prepped = prepare_params(params)   # one-time param prep (hoisted per review)

    # Case 1: batch = 8 (single grid step)
    B1 = 8
    z1 = jax.random.normal(kz, (B1, LATENT_DIM), jnp.float32)
    t1 = jax.random.randint(kt, (B1,), 0, 100)       # integer timesteps, like torch
    out1 = diffusion_forward(z1, t1, prepped)
    jax.block_until_ready(out1)
    ref1 = reference(z1, t1, params)
    assert out1.shape == (B1, LATENT_DIM)
    assert jnp.allclose(out1, ref1, rtol=5e-2, atol=1e-1), \
        f"max_err={float(jnp.max(jnp.abs(out1 - ref1)))}"

    # Case 2: batch = 20 (non-multiple of 8 -> padding + 2 parallel grid steps)
    B2 = 20
    z2 = jax.random.normal(kz2, (B2, LATENT_DIM), jnp.float32)
    t2 = jax.random.randint(kt2, (B2,), 0, 100)
    out2 = diffusion_forward(z2, t2, prepped)
    jax.block_until_ready(out2)
    ref2 = reference(z2, t2, params)
    assert out2.shape == (B2, LATENT_DIM)
    assert jnp.allclose(out2, ref2, rtol=5e-2, atol=1e-1), \
        f"max_err={float(jnp.max(jnp.abs(out2 - ref2)))}"

    print("KERNEL_OK")
</pallas_src>

<mosaic_0001>
module attributes {stable_mosaic.version = 11 : i64} {
  func.func @diffusion_kernel(%arg0: i32, %arg1: memref<8x1xf32, #tpu.memory_space<vmem>>, %arg2: memref<8x128xf32, #tpu.memory_space<vmem>>, %arg3: memref<256x128xbf16, #tpu.memory_space<vmem>>, %arg4: memref<3x128x256xbf16, #tpu.memory_space<vmem>>, %arg5: memref<3x256x128xbf16, #tpu.memory_space<vmem>>, %arg6: memref<128x128xf32, #tpu.memory_space<vmem>>, %arg7: memref<11x256xf32, #tpu.memory_space<vmem>>, %arg8: memref<11x128xf32, #tpu.memory_space<vmem>>, %arg9: memref<8x128xf32, #tpu.memory_space<vmem>>) attributes {dimension_semantics = [#tpu.dimension_semantics<parallel>], iteration_bounds = array<i64: 1>, scalar_prefetch = 0 : i64, scratch_operands = 0 : i64, tpu.core_type = #tpu.core_type<tc>, window_params = [{transform_indices = @transform_0, window_bounds = array<i64: 8, 1>}, {transform_indices = @transform_1, window_bounds = array<i64: 8, 128>}, {pipeline_mode = #tpu.pipeline_mode<synchronous>, transform_indices = @transform_2, window_bounds = array<i64: 256, 128>}, {pipeline_mode = #tpu.pipeline_mode<synchronous>, transform_indices = @transform_3, window_bounds = array<i64: 3, 128, 256>}, {pipeline_mode = #tpu.pipeline_mode<synchronous>, transform_indices = @transform_4, window_bounds = array<i64: 3, 256, 128>}, {pipeline_mode = #tpu.pipeline_mode<synchronous>, transform_indices = @transform_5, window_bounds = array<i64: 128, 128>}, {pipeline_mode = #tpu.pipeline_mode<synchronous>, transform_indices = @transform_6, window_bounds = array<i64: 11, 256>}, {pipeline_mode = #tpu.pipeline_mode<synchronous>, transform_indices = @transform_7, window_bounds = array<i64: 11, 128>}, {transform_indices = @transform_8, window_bounds = array<i64: 8, 128>}]} {
    %c0 = arith.constant 0 : index
    %c0_0 = arith.constant 0 : index
    %0 = vector.load %arg7[%c0, %c0_0] : memref<11x256xf32, #tpu.memory_space<vmem>>, vector<1x256xf32>
    %c1 = arith.constant 1 : index
    %c0_1 = arith.constant 0 : index
    %1 = vector.load %arg7[%c1, %c0_1] : memref<11x256xf32, #tpu.memory_space<vmem>>, vector<1x256xf32>
    %c0_2 = arith.constant 0 : index
    %c0_3 = arith.constant 0 : index
    %2 = vector.load %arg8[%c0_2, %c0_3] : memref<11x128xf32, #tpu.memory_space<vmem>>, vector<1x128xf32>
    %c10 = arith.constant 10 : index
    %c0_4 = arith.constant 0 : index
    %3 = vector.load %arg8[%c10, %c0_4] : memref<11x128xf32, #tpu.memory_space<vmem>>, vector<1x128xf32>
    %c0_5 = arith.constant 0 : index
    %c0_6 = arith.constant 0 : index
    %4 = vector.load %arg1[%c0_5, %c0_6] : memref<8x1xf32, #tpu.memory_space<vmem>>, vector<8x1xf32>
    %5 = vector.broadcast %4 : vector<8x1xf32> to vector<8x256xf32>
    %6 = vector.broadcast %0 : vector<1x256xf32> to vector<8x256xf32>
    %7 = arith.mulf %5, %6 : vector<8x256xf32>
    %8 = vector.broadcast %1 : vector<1x256xf32> to vector<8x256xf32>
    %9 = arith.addf %7, %8 : vector<8x256xf32>
    %cst = arith.constant 0.000000e+00 : f32
    %10 = vector.broadcast %cst : f32 to vector<8x256xf32>
    %11 = arith.maximumf %9, %10 : vector<8x256xf32>
    %12 = arith.truncf %11 : vector<8x256xf32> to vector<8x256xbf16>
    %c0_7 = arith.constant 0 : index
    %c0_8 = arith.constant 0 : index
    %13 = vector.load %arg3[%c0_7, %c0_8] : memref<256x128xbf16, #tpu.memory_space<vmem>>, vector<256x128xbf16>
    %cst_9 = arith.constant dense<0.000000e+00> : vector<8x128xf32>
    %14 = tpu.matmul %12, %13, %cst_9 {dimension_numbers = #tpu.dot_dimension_numbers<[1], [0], [0], [1], [0, 0, 1, 1], [], []>} : vector<8x256xbf16>, vector<256x128xbf16>, vector<8x128xf32> -> vector<8x128xf32>
    %15 = vector.broadcast %2 : vector<1x128xf32> to vector<8x128xf32>
    %16 = arith.addf %14, %15 : vector<8x128xf32>
    %c0_10 = arith.constant 0 : index
    %c0_11 = arith.constant 0 : index
    %17 = vector.load %arg2[%c0_10, %c0_11] : memref<8x128xf32, #tpu.memory_space<vmem>>, vector<8x128xf32>
    %c2 = arith.constant 2 : index
    %c0_12 = arith.constant 0 : index
    %18 = vector.load %arg7[%c2, %c0_12] : memref<11x256xf32, #tpu.memory_space<vmem>>, vector<1x256xf32>
    %c5 = arith.constant 5 : index
    %c0_13 = arith.constant 0 : index
    %19 = vector.load %arg7[%c5, %c0_13] : memref<11x256xf32, #tpu.memory_space<vmem>>, vector<1x256xf32>
    %c8 = arith.constant 8 : index
    %c0_14 = arith.constant 0 : index
    %20 = vector.load %arg7[%c8, %c0_14] : memref<11x256xf32, #tpu.memory_space<vmem>>, vector<1x256xf32>
    %c1_15 = arith.constant 1 : index
    %c0_16 = arith.constant 0 : index
    %21 = vector.load %arg8[%c1_15, %c0_16] : memref<11x128xf32, #tpu.memory_space<vmem>>, vector<1x128xf32>
    %c4 = arith.constant 4 : index
    %c0_17 = arith.constant 0 : index
    %22 = vector.load %arg8[%c4, %c0_17] : memref<11x128xf32, #tpu.memory_space<vmem>>, vector<1x128xf32>
    %c7 = arith.constant 7 : index
    %c0_18 = arith.constant 0 : index
    %23 = vector.load %arg8[%c7, %c0_18] : memref<11x128xf32, #tpu.memory_space<vmem>>, vector<1x128xf32>
    %24 = arith.addf %17, %16 : vector<8x128xf32>
    %25 = arith.truncf %24 : vector<8x128xf32> to vector<8x128xbf16>
    %c0_19 = arith.constant 0 : index
    %c0_20 = arith.constant 0 : index
    %c0_21 = arith.constant 0 : index
    %26 = vector.load %arg4[%c0_19, %c0_20, %c0_21] : memref<3x128x256xbf16, #tpu.memory_space<vmem>>, vector<1x128x256xbf16>
    %27 = vector.shape_cast %26 : vector<1x128x256xbf16> to vector<128x256xbf16>
    %cst_22 = arith.constant dense<0.000000e+00> : vector<8x256xf32>
    %28 = tpu.matmul %25, %27, %cst_22 {dimension_numbers = #tpu.dot_dimension_numbers<[1], [0], [0], [1], [0, 0, 1, 1], [], []>} : vector<8x128xbf16>, vector<128x256xbf16>, vector<8x256xf32> -> vector<8x256xf32>
    %29 = vector.broadcast %18 : vector<1x256xf32> to vector<8x256xf32>
    %30 = arith.addf %28, %29 : vector<8x256xf32>
    %cst_23 = arith.constant dense<0.000000e+00> : vector<8xf32>
    %31 = vector.multi_reduction <add>, %30, %cst_23 [1] : vector<8x256xf32> to vector<8xf32>
    %32 = vector.shape_cast %31 : vector<8xf32> to vector<8x1xf32>
    %33 = arith.mulf %30, %30 : vector<8x256xf32>
    %cst_24 = arith.constant dense<0.000000e+00> : vector<8xf32>
    %34 = vector.multi_reduction <add>, %33, %cst_24 [1] : vector<8x256xf32> to vector<8xf32>
    %35 = vector.shape_cast %34 : vector<8xf32> to vector<8x1xf32>
    %cst_25 = arith.constant 3.906250e-03 : f32
    %36 = vector.broadcast %cst_25 : f32 to vector<8x1xf32>
    %37 = arith.mulf %32, %36 : vector<8x1xf32>
    %cst_26 = arith.constant 3.906250e-03 : f32
    %38 = vector.broadcast %cst_26 : f32 to vector<8x1xf32>
    %39 = arith.mulf %35, %38 : vector<8x1xf32>
    %40 = arith.mulf %37, %37 : vector<8x1xf32>
    %41 = arith.subf %39, %40 : vector<8x1xf32>
    %cst_27 = arith.constant 0.000000e+00 : f32
    %42 = vector.broadcast %cst_27 : f32 to vector<8x1xf32>
    %43 = arith.maximumf %41, %42 : vector<8x1xf32>
    %44 = vector.broadcast %37 : vector<8x1xf32> to vector<8x256xf32>
    %45 = arith.subf %30, %44 : vector<8x256xf32>
    %cst_28 = arith.constant 9.99999974E-6 : f32
    %46 = vector.broadcast %cst_28 : f32 to vector<8x1xf32>
    %47 = arith.addf %43, %46 : vector<8x1xf32>
    %48 = math.rsqrt %47 : vector<8x1xf32>
    %49 = vector.broadcast %48 : vector<8x1xf32> to vector<8x256xf32>
    %50 = arith.mulf %45, %49 : vector<8x256xf32>
    %51 = vector.broadcast %19 : vector<1x256xf32> to vector<8x256xf32>
    %52 = arith.mulf %50, %51 : vector<8x256xf32>
    %53 = vector.broadcast %20 : vector<1x256xf32> to vector<8x256xf32>
    %54 = arith.addf %52, %53 : vector<8x256xf32>
    %cst_29 = arith.constant 0.000000e+00 : f32
    %55 = vector.broadcast %cst_29 : f32 to vector<8x256xf32>
    %56 = arith.maximumf %54, %55 : vector<8x256xf32>
    %57 = arith.truncf %56 : vector<8x256xf32> to vector<8x256xbf16>
    %c0_30 = arith.constant 0 : index
    %c0_31 = arith.constant 0 : index
    %c0_32 = arith.constant 0 : index
    %58 = vector.load %arg5[%c0_30, %c0_31, %c0_32] : memref<3x256x128xbf16, #tpu.memory_space<vmem>>, vector<1x256x128xbf16>
    %59 = vector.shape_cast %58 : vector<1x256x128xbf16> to vector<256x128xbf16>
    %cst_33 = arith.constant dense<0.000000e+00> : vector<8x128xf32>
    %60 = tpu.matmul %57, %59, %cst_33 {dimension_numbers = #tpu.dot_dimension_numbers<[1], [0], [0], [1], [0, 0, 1, 1], [], []>} : vector<8x256xbf16>, vector<256x128xbf16>, vector<8x128xf32> -> vector<8x128xf32>
    %61 = vector.broadcast %21 : vector<1x128xf32> to vector<8x128xf32>
    %62 = arith.addf %60, %61 : vector<8x128xf32>
    %cst_34 = arith.constant dense<0.000000e+00> : vector<8xf32>
    %63 = vector.multi_reduction <add>, %62, %cst_34 [1] : vector<8x128xf32> to vector<8xf32>
    %64 = vector.shape_cast %63 : vector<8xf32> to vector<8x1xf32>
    %65 = arith.mulf %62, %62 : vector<8x128xf32>
    %cst_35 = arith.constant dense<0.000000e+00> : vector<8xf32>
    %66 = vector.multi_reduction <add>, %65, %cst_35 [1] : vector<8x128xf32> to vector<8xf32>
    %67 = vector.shape_cast %66 : vector<8xf32> to vector<8x1xf32>
    %cst_36 = arith.constant 7.812500e-03 : f32
    %68 = vector.broadcast %cst_36 : f32 to vector<8x1xf32>
    %69 = arith.mulf %64, %68 : vector<8x1xf32>
    %cst_37 = arith.constant 7.812500e-03 : f32
    %70 = vector.broadcast %cst_37 : f32 to vector<8x1xf32>
    %71 = arith.mulf %67, %70 : vector<8x1xf32>
    %72 = arith.mulf %69, %69 : vector<8x1xf32>
    %73 = arith.subf %71, %72 : vector<8x1xf32>
    %cst_38 = arith.constant 0.000000e+00 : f32
    %74 = vector.broadcast %cst_38 : f32 to vector<8x1xf32>
    %75 = arith.maximumf %73, %74 : vector<8x1xf32>
    %76 = vector.broadcast %69 : vector<8x1xf32> to vector<8x128xf32>
    %77 = arith.subf %62, %76 : vector<8x128xf32>
    %cst_39 = arith.constant 9.99999974E-6 : f32
    %78 = vector.broadcast %cst_39 : f32 to vector<8x1xf32>
    %79 = arith.addf %75, %78 : vector<8x1xf32>
    %80 = math.rsqrt %79 : vector<8x1xf32>
    %81 = vector.broadcast %80 : vector<8x1xf32> to vector<8x128xf32>
    %82 = arith.mulf %77, %81 : vector<8x128xf32>
    %83 = vector.broadcast %22 : vector<1x128xf32> to vector<8x128xf32>
    %84 = arith.mulf %82, %83 : vector<8x128xf32>
    %85 = vector.broadcast %23 : vector<1x128xf32> to vector<8x128xf32>
    %86 = arith.addf %84, %85 : vector<8x128xf32>
    %87 = arith.addf %86, %17 : vector<8x128xf32>
    %c3 = arith.constant 3 : index
    %c0_40 = arith.constant 0 : index
    %88 = vector.load %arg7[%c3, %c0_40] : memref<11x256xf32, #tpu.memory_space<vmem>>, vector<1x256xf32>
    %c6 = arith.constant 6 : index
    %c0_41 = arith.constant 0 : index
    %89 = vector.load %arg7[%c6, %c0_41] : memref<11x256xf32, #tpu.memory_space<vmem>>, vector<1x256xf32>
    %c9 = arith.constant 9 : index
    %c0_42 = arith.constant 0 : index
    %90 = vector.load %arg7[%c9, %c0_42] : memref<11x256xf32, #tpu.memory_space<vmem>>, vector<1x256xf32>
    %c2_43 = arith.constant 2 : index
    %c0_44 = arith.constant 0 : index
    %91 = vector.load %arg8[%c2_43, %c0_44] : memref<11x128xf32, #tpu.memory_space<vmem>>, vector<1x128xf32>
    %c5_45 = arith.constant 5 : index
    %c0_46 = arith.constant 0 : index
    %92 = vector.load %arg8[%c5_45, %c0_46] : memref<11x128xf32, #tpu.memory_space<vmem>>, vector<1x128xf32>
    %c8_47 = arith.constant 8 : index
    %c0_48 = arith.constant 0 : index
    %93 = vector.load %arg8[%c8_47, %c0_48] : memref<11x128xf32, #tpu.memory_space<vmem>>, vector<1x128xf32>
    %94 = arith.addf %87, %16 : vector<8x128xf32>
    %95 = arith.truncf %94 : vector<8x128xf32> to vector<8x128xbf16>
    %c1_49 = arith.constant 1 : index
    %c0_50 = arith.constant 0 : index
    %c0_51 = arith.constant 0 : index
    %96 = vector.load %arg4[%c1_49, %c0_50, %c0_51] : memref<3x128x256xbf16, #tpu.memory_space<vmem>>, vector<1x128x256xbf16>
    %97 = vector.shape_cast %96 : vector<1x128x256xbf16> to vector<128x256xbf16>
    %cst_52 = arith.constant dense<0.000000e+00> : vector<8x256xf32>
    %98 = tpu.matmul %95, %97, %cst_52 {dimension_numbers = #tpu.dot_dimension_numbers<[1], [0], [0], [1], [0, 0, 1, 1], [], []>} : vector<8x128xbf16>, vector<128x256xbf16>, vector<8x256xf32> -> vector<8x256xf32>
    %99 = vector.broadcast %88 : vector<1x256xf32> to vector<8x256xf32>
    %100 = arith.addf %98, %99 : vector<8x256xf32>
    %cst_53 = arith.constant dense<0.000000e+00> : vector<8xf32>
    %101 = vector.multi_reduction <add>, %100, %cst_53 [1] : vector<8x256xf32> to vector<8xf32>
    %102 = vector.shape_cast %101 : vector<8xf32> to vector<8x1xf32>
    %103 = arith.mulf %100, %100 : vector<8x256xf32>
    %cst_54 = arith.constant dense<0.000000e+00> : vector<8xf32>
    %104 = vector.multi_reduction <add>, %103, %cst_54 [1] : vector<8x256xf32> to vector<8xf32>
    %105 = vector.shape_cast %104 : vector<8xf32> to vector<8x1xf32>
    %cst_55 = arith.constant 3.906250e-03 : f32
    %106 = vector.broadcast %cst_55 : f32 to vector<8x1xf32>
    %107 = arith.mulf %102, %106 : vector<8x1xf32>
    %cst_56 = arith.constant 3.906250e-03 : f32
    %108 = vector.broadcast %cst_56 : f32 to vector<8x1xf32>
    %109 = arith.mulf %105, %108 : vector<8x1xf32>
    %110 = arith.mulf %107, %107 : vector<8x1xf32>
    %111 = arith.subf %109, %110 : vector<8x1xf32>
    %cst_57 = arith.constant 0.000000e+00 : f32
    %112 = vector.broadcast %cst_57 : f32 to vector<8x1xf32>
    %113 = arith.maximumf %111, %112 : vector<8x1xf32>
    %114 = vector.broadcast %107 : vector<8x1xf32> to vector<8x256xf32>
    %115 = arith.subf %100, %114 : vector<8x256xf32>
    %cst_58 = arith.constant 9.99999974E-6 : f32
    %116 = vector.broadcast %cst_58 : f32 to vector<8x1xf32>
    %117 = arith.addf %113, %116 : vector<8x1xf32>
    %118 = math.rsqrt %117 : vector<8x1xf32>
    %119 = vector.broadcast %118 : vector<8x1xf32> to vector<8x256xf32>
    %120 = arith.mulf %115, %119 : vector<8x256xf32>
    %121 = vector.broadcast %89 : vector<1x256xf32> to vector<8x256xf32>
    %122 = arith.mulf %120, %121 : vector<8x256xf32>
    %123 = vector.broadcast %90 : vector<1x256xf32> to vector<8x256xf32>
    %124 = arith.addf %122, %123 : vector<8x256xf32>
    %cst_59 = arith.constant 0.000000e+00 : f32
    %125 = vector.broadcast %cst_59 : f32 to vector<8x256xf32>
    %126 = arith.maximumf %124, %125 : vector<8x256xf32>
    %127 = arith.truncf %126 : vector<8x256xf32> to vector<8x256xbf16>
    %c1_60 = arith.constant 1 : index
    %c0_61 = arith.constant 0 : index
    %c0_62 = arith.constant 0 : index
    %128 = vector.load %arg5[%c1_60, %c0_61, %c0_62] : memref<3x256x128xbf16, #tpu.memory_space<vmem>>, vector<1x256x128xbf16>
    %129 = vector.shape_cast %128 : vector<1x256x128xbf16> to vector<256x128xbf16>
    %cst_63 = arith.constant dense<0.000000e+00> : vector<8x128xf32>
    %130 = tpu.matmul %127, %129, %cst_63 {dimension_numbers = #tpu.dot_dimension_numbers<[1], [0], [0], [1], [0, 0, 1, 1], [], []>} : vector<8x256xbf16>, vector<256x128xbf16>, vector<8x128xf32> -> vector<8x128xf32>
    %131 = vector.broadcast %91 : vector<1x128xf32> to vector<8x128xf32>
    %132 = arith.addf %130, %131 : vector<8x128xf32>
    %cst_64 = arith.constant dense<0.000000e+00> : vector<8xf32>
    %133 = vector.multi_reduction <add>, %132, %cst_64 [1] : vector<8x128xf32> to vector<8xf32>
    %134 = vector.shape_cast %133 : vector<8xf32> to vector<8x1xf32>
    %135 = arith.mulf %132, %132 : vector<8x128xf32>
    %cst_65 = arith.constant dense<0.000000e+00> : vector<8xf32>
    %136 = vector.multi_reduction <add>, %135, %cst_65 [1] : vector<8x128xf32> to vector<8xf32>
    %137 = vector.shape_cast %136 : vector<8xf32> to vector<8x1xf32>
    %cst_66 = arith.constant 7.812500e-03 : f32
    %138 = vector.broadcast %cst_66 : f32 to vector<8x1xf32>
    %139 = arith.mulf %134, %138 : vector<8x1xf32>
    %cst_67 = arith.constant 7.812500e-03 : f32
    %140 = vector.broadcast %cst_67 : f32 to vector<8x1xf32>
    %141 = arith.mulf %137, %140 : vector<8x1xf32>
    %142 = arith.mulf %139, %139 : vector<8x1xf32>
    %143 = arith.subf %141, %142 : vector<8x1xf32>
    %cst_68 = arith.constant 0.000000e+00 : f32
    %144 = vector.broadcast %cst_68 : f32 to vector<8x1xf32>
    %145 = arith.maximumf %143, %144 : vector<8x1xf32>
    %146 = vector.broadcast %139 : vector<8x1xf32> to vector<8x128xf32>
    %147 = arith.subf %132, %146 : vector<8x128xf32>
    %cst_69 = arith.constant 9.99999974E-6 : f32
    %148 = vector.broadcast %cst_69 : f32 to vector<8x1xf32>
    %149 = arith.addf %145, %148 : vector<8x1xf32>
    %150 = math.rsqrt %149 : vector<8x1xf32>
    %151 = vector.broadcast %150 : vector<8x1xf32> to vector<8x128xf32>
    %152 = arith.mulf %147, %151 : vector<8x128xf32>
    %153 = vector.broadcast %92 : vector<1x128xf32> to vector<8x128xf32>
    %154 = arith.mulf %152, %153 : vector<8x128xf32>
    %155 = vector.broadcast %93 : vector<1x128xf32> to vector<8x128xf32>
    %156 = arith.addf %154, %155 : vector<8x128xf32>
    %157 = arith.addf %156, %87 : vector<8x128xf32>
    %c4_70 = arith.constant 4 : index
    %c0_71 = arith.constant 0 : index
    %158 = vector.load %arg7[%c4_70, %c0_71] : memref<11x256xf32, #tpu.memory_space<vmem>>, vector<1x256xf32>
    %c7_72 = arith.constant 7 : index
    %c0_73 = arith.constant 0 : index
    %159 = vector.load %arg7[%c7_72, %c0_73] : memref<11x256xf32, #tpu.memory_space<vmem>>, vector<1x256xf32>
    %c10_74 = arith.constant 10 : index
    %c0_75 = arith.constant 0 : index
    %160 = vector.load %arg7[%c10_74, %c0_75] : memref<11x256xf32, #tpu.memory_space<vmem>>, vector<1x256xf32>
    %c3_76 = arith.constant 3 : index
    %c0_77 = arith.constant 0 : index
    %161 = vector.load %arg8[%c3_76, %c0_77] : memref<11x128xf32, #tpu.memory_space<vmem>>, vector<1x128xf32>
    %c6_78 = arith.constant 6 : index
    %c0_79 = arith.constant 0 : index
    %162 = vector.load %arg8[%c6_78, %c0_79] : memref<11x128xf32, #tpu.memory_space<vmem>>, vector<1x128xf32>
    %c9_80 = arith.constant 9 : index
    %c0_81 = arith.constant 0 : index
    %163 = vector.load %arg8[%c9_80, %c0_81] : memref<11x128xf32, #tpu.memory_space<vmem>>, vector<1x128xf32>
    %164 = arith.addf %157, %16 : vector<8x128xf32>
    %165 = arith.truncf %164 : vector<8x128xf32> to vector<8x128xbf16>
    %c2_82 = arith.constant 2 : index
    %c0_83 = arith.constant 0 : index
    %c0_84 = arith.constant 0 : index
    %166 = vector.load %arg4[%c2_82, %c0_83, %c0_84] : memref<3x128x256xbf16, #tpu.memory_space<vmem>>, vector<1x128x256xbf16>
    %167 = vector.shape_cast %166 : vector<1x128x256xbf16> to vector<128x256xbf16>
    %cst_85 = arith.constant dense<0.000000e+00> : vector<8x256xf32>
    %168 = tpu.matmul %165, %167, %cst_85 {dimension_numbers = #tpu.dot_dimension_numbers<[1], [0], [0], [1], [0, 0, 1, 1], [], []>} : vector<8x128xbf16>, vector<128x256xbf16>, vector<8x256xf32> -> vector<8x256xf32>
    %169 = vector.broadcast %158 : vector<1x256xf32> to vector<8x256xf32>
    %170 = arith.addf %168, %169 : vector<8x256xf32>
    %cst_86 = arith.constant dense<0.000000e+00> : vector<8xf32>
    %171 = vector.multi_reduction <add>, %170, %cst_86 [1] : vector<8x256xf32> to vector<8xf32>
    %172 = vector.shape_cast %171 : vector<8xf32> to vector<8x1xf32>
    %173 = arith.mulf %170, %170 : vector<8x256xf32>
    %cst_87 = arith.constant dense<0.000000e+00> : vector<8xf32>
    %174 = vector.multi_reduction <add>, %173, %cst_87 [1] : vector<8x256xf32> to vector<8xf32>
    %175 = vector.shape_cast %174 : vector<8xf32> to vector<8x1xf32>
    %cst_88 = arith.constant 3.906250e-03 : f32
    %176 = vector.broadcast %cst_88 : f32 to vector<8x1xf32>
    %177 = arith.mulf %172, %176 : vector<8x1xf32>
    %cst_89 = arith.constant 3.906250e-03 : f32
    %178 = vector.broadcast %cst_89 : f32 to vector<8x1xf32>
    %179 = arith.mulf %175, %178 : vector<8x1xf32>
    %180 = arith.mulf %177, %177 : vector<8x1xf32>
    %181 = arith.subf %179, %180 : vector<8x1xf32>
    %cst_90 = arith.constant 0.000000e+00 : f32
    %182 = vector.broadcast %cst_90 : f32 to vector<8x1xf32>
    %183 = arith.maximumf %181, %182 : vector<8x1xf32>
    %184 = vector.broadcast %177 : vector<8x1xf32> to vector<8x256xf32>
    %185 = arith.subf %170, %184 : vector<8x256xf32>
    %cst_91 = arith.constant 9.99999974E-6 : f32
    %186 = vector.broadcast %cst_91 : f32 to vector<8x1xf32>
    %187 = arith.addf %183, %186 : vector<8x1xf32>
    %188 = math.rsqrt %187 : vector<8x1xf32>
    %189 = vector.broadcast %188 : vector<8x1xf32> to vector<8x256xf32>
    %190 = arith.mulf %185, %189 : vector<8x256xf32>
    %191 = vector.broadcast %159 : vector<1x256xf32> to vector<8x256xf32>
    %192 = arith.mulf %190, %191 : vector<8x256xf32>
    %193 = vector.broadcast %160 : vector<1x256xf32> to vector<8x256xf32>
    %194 = arith.addf %192, %193 : vector<8x256xf32>
    %cst_92 = arith.constant 0.000000e+00 : f32
    %195 = vector.broadcast %cst_92 : f32 to vector<8x256xf32>
    %196 = arith.maximumf %194, %195 : vector<8x256xf32>
    %197 = arith.truncf %196 : vector<8x256xf32> to vector<8x256xbf16>
    %c2_93 = arith.constant 2 : index
    %c0_94 = arith.constant 0 : index
    %c0_95 = arith.constant 0 : index
    %198 = vector.load %arg5[%c2_93, %c0_94, %c0_95] : memref<3x256x128xbf16, #tpu.memory_space<vmem>>, vector<1x256x128xbf16>
    %199 = vector.shape_cast %198 : vector<1x256x128xbf16> to vector<256x128xbf16>
    %cst_96 = arith.constant dense<0.000000e+00> : vector<8x128xf32>
    %200 = tpu.matmul %197, %199, %cst_96 {dimension_numbers = #tpu.dot_dimension_numbers<[1], [0], [0], [1], [0, 0, 1, 1], [], []>} : vector<8x256xbf16>, vector<256x128xbf16>, vector<8x128xf32> -> vector<8x128xf32>
    %201 = vector.broadcast %161 : vector<1x128xf32> to vector<8x128xf32>
    %202 = arith.addf %200, %201 : vector<8x128xf32>
    %cst_97 = arith.constant dense<0.000000e+00> : vector<8xf32>
    %203 = vector.multi_reduction <add>, %202, %cst_97 [1] : vector<8x128xf32> to vector<8xf32>
    %204 = vector.shape_cast %203 : vector<8xf32> to vector<8x1xf32>
    %205 = arith.mulf %202, %202 : vector<8x128xf32>
    %cst_98 = arith.constant dense<0.000000e+00> : vector<8xf32>
    %206 = vector.multi_reduction <add>, %205, %cst_98 [1] : vector<8x128xf32> to vector<8xf32>
    %207 = vector.shape_cast %206 : vector<8xf32> to vector<8x1xf32>
    %cst_99 = arith.constant 7.812500e-03 : f32
    %208 = vector.broadcast %cst_99 : f32 to vector<8x1xf32>
    %209 = arith.mulf %204, %208 : vector<8x1xf32>
    %cst_100 = arith.constant 7.812500e-03 : f32
    %210 = vector.broadcast %cst_100 : f32 to vector<8x1xf32>
    %211 = arith.mulf %207, %210 : vector<8x1xf32>
    %212 = arith.mulf %209, %209 : vector<8x1xf32>
    %213 = arith.subf %211, %212 : vector<8x1xf32>
    %cst_101 = arith.constant 0.000000e+00 : f32
    %214 = vector.broadcast %cst_101 : f32 to vector<8x1xf32>
    %215 = arith.maximumf %213, %214 : vector<8x1xf32>
    %216 = vector.broadcast %209 : vector<8x1xf32> to vector<8x128xf32>
    %217 = arith.subf %202, %216 : vector<8x128xf32>
    %cst_102 = arith.constant 9.99999974E-6 : f32
    %218 = vector.broadcast %cst_102 : f32 to vector<8x1xf32>
    %219 = arith.addf %215, %218 : vector<8x1xf32>
    %220 = math.rsqrt %219 : vector<8x1xf32>
    %221 = vector.broadcast %220 : vector<8x1xf32> to vector<8x128xf32>
    %222 = arith.mulf %217, %221 : vector<8x128xf32>
    %223 = vector.broadcast %162 : vector<1x128xf32> to vector<8x128xf32>
    %224 = arith.mulf %222, %223 : vector<8x128xf32>
    %225 = vector.broadcast %163 : vector<1x128xf32> to vector<8x128xf32>
    %226 = arith.addf %224, %225 : vector<8x128xf32>
    %227 = arith.addf %226, %157 : vector<8x128xf32>
    %c0_103 = arith.constant 0 : index
    %c0_104 = arith.constant 0 : index
    %228 = vector.load %arg6[%c0_103, %c0_104] : memref<128x128xf32, #tpu.memory_space<vmem>>, vector<128x128xf32>
    %cst_105 = arith.constant dense<0.000000e+00> : vector<8x128xf32>
    %229 = tpu.matmul %227, %228, %cst_105 {dimension_numbers = #tpu.dot_dimension_numbers<[1], [0], [0], [1], [0, 0, 1, 1], [], []>} : vector<8x128xf32>, vector<128x128xf32>, vector<8x128xf32> -> vector<8x128xf32>
    %230 = vector.broadcast %3 : vector<1x128xf32> to vector<8x128xf32>
    %231 = arith.addf %229, %230 : vector<8x128xf32>
    %c0_106 = arith.constant 0 : index
    %c0_107 = arith.constant 0 : index
    %232 = vector.load %arg9[%c0_106, %c0_107] : memref<8x128xf32, #tpu.memory_space<vmem>>, vector<8x128xf32>
    tpu.vector_store %arg9[%c0_106, %c0_107], %231 {strides = array<i32>} : memref<8x128xf32, #tpu.memory_space<vmem>>, vector<8x128xf32>,
    return
  }
  func.func @transform_0(%arg0: i32) -> (i32, i32) {
    %c0_i32 = arith.constant 0 : i32
    %c0_i32_0 = arith.constant 0 : i32
    return %arg0, %c0_i32 : i32, i32
  }
  func.func @transform_1(%arg0: i32) -> (i32, i32) {
    %c0_i32 = arith.constant 0 : i32
    %c0_i32_0 = arith.constant 0 : i32
    return %arg0, %c0_i32 : i32, i32
  }
  func.func @transform_2(%arg0: i32) -> (i32, i32) {
    %c0_i32 = arith.constant 0 : i32
    %c0_i32_0 = arith.constant 0 : i32
    %c0_i32_1 = arith.constant 0 : i32
    return %c0_i32, %c0_i32_0 : i32, i32
  }
  func.func @transform_3(%arg0: i32) -> (i32, i32, i32) {
    %c0_i32 = arith.constant 0 : i32
    %c0_i32_0 = arith.constant 0 : i32
    %c0_i32_1 = arith.constant 0 : i32
    %c0_i32_2 = arith.constant 0 : i32
    return %c0_i32, %c0_i32_0, %c0_i32_1 : i32, i32, i32
  }
  func.func @transform_4(%arg0: i32) -> (i32, i32, i32) {
    %c0_i32 = arith.constant 0 : i32
    %c0_i32_0 = arith.constant 0 : i32
    %c0_i32_1 = arith.constant 0 : i32
    %c0_i32_2 = arith.constant 0 : i32
    return %c0_i32, %c0_i32_0, %c0_i32_1 : i32, i32, i32
  }
  func.func @transform_5(%arg0: i32) -> (i32, i32) {
    %c0_i32 = arith.constant 0 : i32
    %c0_i32_0 = arith.constant 0 : i32
    %c0_i32_1 = arith.constant 0 : i32
    return %c0_i32, %c0_i32_0 : i32, i32
  }
  func.func @transform_6(%arg0: i32) -> (i32, i32) {
    %c0_i32 = arith.constant 0 : i32
    %c0_i32_0 = arith.constant 0 : i32
    %c0_i32_1 = arith.constant 0 : i32
    return %c0_i32, %c0_i32_0 : i32, i32
  }
  func.func @transform_7(%arg0: i32) -> (i32, i32) {
    %c0_i32 = arith.constant 0 : i32
    %c0_i32_0 = arith.constant 0 : i32
    %c0_i32_1 = arith.constant 0 : i32
    return %c0_i32, %c0_i32_0 : i32, i32
  }
  func.func @transform_8(%arg0: i32) -> (i32, i32) {
    %c0_i32 = arith.constant 0 : i32
    %c0_i32_0 = arith.constant 0 : i32
    return %arg0, %c0_i32 : i32, i32
  }
}

</mosaic_0001>

<llo_original>
// kernel: tpu_custom_call.1
$region0: #{tpu_custom_call.1}
  #allocation0 [shape = 'u32[]', space=smem, size = 0x4, offset = 0x4, fixed_abs, tag = 'smem constant byte address 0x4 - core index']
  #allocation1 [shape = 'u32[72,128]{1,0:T(1,128)}', space=vmem, size = 0x9000, scoped, tag = 'internal scratch']
  %s0 = inlined_call_operand.vmem [shape: f32[8,1], index: 0, kind: input, shape index: {}]
  %s1 = inlined_call_operand.vmem [shape: f32[8,128], index: 1, kind: input, shape index: {}]
  %s2 = inlined_call_operand.hbm [shape: bf16[256,128], index: 2, kind: input, shape index: {}]
  %s3 = inlined_call_operand.hbm [shape: bf16[3,128,256], index: 3, kind: input, shape index: {}]
  %s4 = inlined_call_operand.hbm [shape: bf16[3,256,128], index: 4, kind: input, shape index: {}]
  %s5 = inlined_call_operand.hbm [shape: f32[128,128], index: 5, kind: input, shape index: {}]
  %s6 = inlined_call_operand.hbm [shape: f32[11,256], index: 6, kind: input, shape index: {}]
  %s7 = inlined_call_operand.hbm [shape: f32[11,128], index: 7, kind: input, shape index: {}]
  %s8 = inlined_call_operand.hbm [shape: f32[8,128], index: 8, kind: output, shape index: {}]
  %s9 = sld [smem:[#allocation0]]
  $region66: #{tpu_custom_call.1} parent=0
    _
  %s11 = ssub.s32 1, %s9
  %s12 = scalar_select 0, %s11, %s9
  $region1: #{tpu_custom_call.1} parent=0
    #allocation2 [shape = 'u8[65536]{0}', space=vmem, size = 0x10000, scoped, tag = 'input window, operand 2, single buffered']
    #allocation3 [shape = 's32[1]{0}', space=sflag, size = 0x4, scoped, tag = 'scoped memory for tpu_custom_call.1']
    #allocation4 [shape = 's32[1]{0}', space=sflag, size = 0x4, scoped, tag = 'scoped memory for tpu_custom_call.1']
    #allocation5 [shape = 'u8[196608]{0}', space=vmem, size = 0x30000, scoped, tag = 'input window, operand 3, single buffered']
    #allocation6 [shape = 's32[1]{0}', space=sflag, size = 0x4, scoped, tag = 'scoped memory for tpu_custom_call.1']
    #allocation7 [shape = 'u8[196608]{0}', space=vmem, size = 0x30000, scoped, tag = 'input window, operand 4, single buffered']
    #allocation8 [shape = 'u8[65536]{0}', space=vmem, size = 0x10000, scoped, tag = 'input window, operand 5, single buffered']
    #allocation9 [shape = 's32[1]{0}', space=sflag, size = 0x4, scoped, tag = 'scoped memory for tpu_custom_call.1']
    #allocation10 [shape = 'u8[16384]{0}', space=vmem, size = 0x4000, scoped, tag = 'input window, operand 6, single buffered']
    #allocation11 [shape = 'u8[8192]{0}', space=vmem, size = 0x2000, scoped, tag = 'input window, operand 7, single buffered']
    #allocation12 [shape = 's32[1]{0}', space=sflag, size = 0x4, scoped, tag = 'scoped memory for tpu_custom_call.1']
    #allocation13 [shape = 'u8[4096]{0}', space=vmem, size = 0x1000, scoped, tag = 'output window, operand 0, single buffered']
    %13 = vsyncpa [#allocation3], 0
    %14 = vsyncpa [#allocation6], 0
    %15 = vsyncpa [#allocation9], 0
    %16 = vsyncpa [#allocation12], 0
    %17 = vsyncpa [#allocation4], 0
    // Predicated region
    $region2: #{tpu_custom_call.1} parent=1 // pred_check
      _
    $region3: #{tpu_custom_call.1} parent=1 // pred_check_branch
      %19 = sbr.rel (0) target = $region5
    $region4: #{tpu_custom_call.1} parent=1 // pred_region
      _
    $region5: #{tpu_custom_call.1} parent=1 // pred_fallthru
      _
    // Predicated region
    $region6: #{tpu_custom_call.1} parent=1 // pred_check
      _
    $region7: #{tpu_custom_call.1} parent=1 // pred_check_branch
      %21 = sbr.rel (0) target = $region9
    $region8: #{tpu_custom_call.1} parent=1 // pred_region
      _
    $region9: #{tpu_custom_call.1} parent=1 // pred_fallthru
      _
    // Predicated region
    $region10: #{tpu_custom_call.1} parent=1 // pred_check
      _
    $region11: #{tpu_custom_call.1} parent=1 // pred_check_branch
      %23 = sbr.rel (0) target = $region13
    $region12: #{tpu_custom_call.1} parent=1 // pred_region
      %25 = vsyncadd [#allocation3], 0
      %s26 = sshll.u32 %s2, 4
      %s27 = int_to_ptr.hbm [resolvable:$true] %s26
      %s28 = sshll.u32 [#allocation2], 4
      %s29 = int_to_ptr.vmem [resolvable:$true] %s28
      %34 = dma.hbm_to_vmem [thread:$0]  %s27, 2048, %s29, [#allocation3], 64, 64, 4
    $region13: #{tpu_custom_call.1} parent=1 // pred_fallthru
      _
    // Predicated region
    $region14: #{tpu_custom_call.1} parent=1 // pred_check
      _
    $region15: #{tpu_custom_call.1} parent=1 // pred_check_branch
      %36 = sbr.rel (0) target = $region17
    $region16: #{tpu_custom_call.1} parent=1 // pred_region
      %38 = vsyncadd [#allocation6], 0
      %s39 = sshll.u32 %s3, 4
      %s40 = int_to_ptr.hbm [resolvable:$true] %s39
      %s41 = sshll.u32 [#allocation5], 4
      %s42 = int_to_ptr.vmem [resolvable:$true] %s41
      %47 = dma.hbm_to_vmem [thread:$0]  %s40, 6144, %s42, [#allocation6], 128, 128, 8
    $region17: #{tpu_custom_call.1} parent=1 // pred_fallthru
      _
    // Predicated region
    $region18: #{tpu_custom_call.1} parent=1 // pred_check
      _
    $region19: #{tpu_custom_call.1} parent=1 // pred_check_branch
      %49 = sbr.rel (0) target = $region21
    $region20: #{tpu_custom_call.1} parent=1 // pred_region
      %51 = vsyncadd [#allocation6], 0
      %s52 = sshll.u32 %s4, 4
      %s53 = int_to_ptr.hbm [resolvable:$true] %s52
      %s54 = sshll.u32 [#allocation7], 4
      %s55 = int_to_ptr.vmem [resolvable:$true] %s54
      %60 = dma.hbm_to_vmem [thread:$0]  %s53, 6144, %s55, [#allocation6], 64, 64, 4
    $region21: #{tpu_custom_call.1} parent=1 // pred_fallthru
      _
    // Predicated region
    $region22: #{tpu_custom_call.1} parent=1 // pred_check
      _
    $region23: #{tpu_custom_call.1} parent=1 // pred_check_branch
      %62 = sbr.rel (0) target = $region25
    $region24: #{tpu_custom_call.1} parent=1 // pred_region
      %64 = vsyncadd [#allocation9], 0
      %s65 = sshll.u32 %s5, 4
      %s66 = int_to_ptr.hbm [resolvable:$true] %s65
      %s67 = sshll.u32 [#allocation8], 4
      %s68 = int_to_ptr.vmem [resolvable:$true] %s67
      %73 = dma.hbm_to_vmem [thread:$0]  %s66, 2048, %s68, [#allocation9], 128, 128, 8
    $region25: #{tpu_custom_call.1} parent=1 // pred_fallthru
      _
    // Predicated region
    $region26: #{tpu_custom_call.1} parent=1 // pred_check
      _
    $region27: #{tpu_custom_call.1} parent=1 // pred_check_branch
      %75 = sbr.rel (0) target = $region29
    $region28: #{tpu_custom_call.1} parent=1 // pred_region
      %77 = vsyncadd [#allocation9], 0
      %s78 = sshll.u32 %s6, 4
      %s79 = int_to_ptr.hbm [resolvable:$true] %s78
      %s80 = sshll.u32 [#allocation10], 4
      %s81 = int_to_ptr.vmem [resolvable:$true] %s80
      %86 = dma.hbm_to_vmem [thread:$0]  %s79, 512, %s81, [#allocation9], 256, 256, 16
    $region29: #{tpu_custom_call.1} parent=1 // pred_fallthru
      _
    // Predicated region
    $region30: #{tpu_custom_call.1} parent=1 // pred_check
      _
    $region31: #{tpu_custom_call.1} parent=1 // pred_check_branch
      %88 = sbr.rel (0) target = $region33
    $region32: #{tpu_custom_call.1} parent=1 // pred_region
      %90 = vsyncadd [#allocation12], 0
      %s91 = sshll.u32 %s7, 4
      %s92 = int_to_ptr.hbm [resolvable:$true] %s91
      %s93 = sshll.u32 [#allocation11], 4
      %s94 = int_to_ptr.vmem [resolvable:$true] %s93
      %99 = dma.hbm_to_vmem [thread:$0]  %s92, 256, %s94, [#allocation12], 128, 128, 8
    $region33: #{tpu_custom_call.1} parent=1 // pred_fallthru
      _
    // Predicated region
    $region34: #{tpu_custom_call.1} parent=1 // pred_check
      _
    $region35: #{tpu_custom_call.1} parent=1 // pred_check_branch
      %101 = sbr.rel (0) target = $region37
    $region36: #{tpu_custom_call.1} parent=1 // pred_region
      %103 = dma.done [#allocation3], 2048
    $region37: #{tpu_custom_call.1} parent=1 // pred_fallthru
      _
    // Predicated region
    $region38: #{tpu_custom_call.1} parent=1 // pred_check
      _
    $region39: #{tpu_custom_call.1} parent=1 // pred_check_branch
      %105 = sbr.rel (0) target = $region41
    $region40: #{tpu_custom_call.1} parent=1 // pred_region
      %107 = dma.done [#allocation6], 6144
    $region41: #{tpu_custom_call.1} parent=1 // pred_fallthru
      _
    // Predicated region
    $region42: #{tpu_custom_call.1} parent=1 // pred_check
      _
    $region43: #{tpu_custom_call.1} parent=1 // pred_check_branch
      %109 = sbr.rel (0) target = $region45
    $region44: #{tpu_custom_call.1} parent=1 // pred_region
      %111 = dma.done [#allocation6], 6144
    $region45: #{tpu_custom_call.1} parent=1 // pred_fallthru
      _
    // Predicated region
    $region46: #{tpu_custom_call.1} parent=1 // pred_check
      _
    $region47: #{tpu_custom_call.1} parent=1 // pred_check_branch
      %113 = sbr.rel (0) target = $region49
    $region48: #{tpu_custom_call.1} parent=1 // pred_region
      %115 = dma.done [#allocation9], 2048
    $region49: #{tpu_custom_call.1} parent=1 // pred_fallthru
      _
    // Predicated region
    $region50: #{tpu_custom_call.1} parent=1 // pred_check
      _
    $region51: #{tpu_custom_call.1} parent=1 // pred_check_branch
      %117 = sbr.rel (0) target = $region53
    $region52: #{tpu_custom_call.1} parent=1 // pred_region
      %119 = dma.done [#allocation9], 512
    $region53: #{tpu_custom_call.1} parent=1 // pred_fallthru
      _
    // Predicated region
    $region54: #{tpu_custom_call.1} parent=1 // pred_check
      _
    $region55: #{tpu_custom_call.1} parent=1 // pred_check_branch
      %121 = sbr.rel (0) target = $region57
    $region56: #{tpu_custom_call.1} parent=1 // pred_region
      %123 = dma.done [#allocation12], 256
    $region57: #{tpu_custom_call.1} parent=1 // pred_fallthru
      _
    %v124 = vld [vmem:[#allocation10] ss:$8 sm:$0x3]
    %s125 = scalar_lea.vmem [#allocation10], 1
    %v126 = vld [vmem:[%s125] ss:$8 sm:$0x3]
    %v127 = vld [vmem:[#allocation11] sm:$0x1]
    %v128 = vld [vmem:[#allocation11 + $0xa] sm:$0x1]
    %v129 = vld [vmem:[%s0] sm:$0xff]
    %131 = vset.pattern.permute.xlu0 0
    %132 = vperm.xlu0 %131, %v129
    %v133 = vpop.permute.xlu0 %132
    %v136 = vperm.slane %v124, 0
    %v137 = vperm.slane %v124, 1
    %v140 = vmul.f32 %v133, %v136
    %v141 = vmul.f32 %v133, %v137
    %v143 = vperm.slane %v126, 0
    %v144 = vperm.slane %v126, 1
    %v147 = vadd.f32 %v140, %v143
    %v148 = vadd.f32 %v141, %v144
    %v149 = vmax.f32 %v147, 0.0
    %v150 = vmax.f32 %v148, 0.0
    %v151 = vpack.c.bf16 %v149, %v149
    %v152 = vpack.c.bf16 %v150, %v150
    %v153 = vld [vmem:[#allocation2] sm:$0xf]
    %v154 = vld [vmem:[#allocation2 + $0x4] sm:$0xf]
    %v155 = vld [vmem:[#allocation2 + $0x8] sm:$0xf]
    %v156 = vld [vmem:[#allocation2 + $0xc] sm:$0xf]
    %v157 = vld [vmem:[#allocation2 + $0x10] sm:$0xf]
    %v158 = vld [vmem:[#allocation2 + $0x14] sm:$0xf]
    %v159 = vld [vmem:[#allocation2 + $0x18] sm:$0xf]
    %v160 = vld [vmem:[#allocation2 + $0x1c] sm:$0xf]
    %v161 = vld [vmem:[#allocation2 + $0x20] sm:$0xf]
    %v162 = vld [vmem:[#allocation2 + $0x24] sm:$0xf]
    %v163 = vld [vmem:[#allocation2 + $0x28] sm:$0xf]
    %v164 = vld [vmem:[#allocation2 + $0x2c] sm:$0xf]
    %v165 = vld [vmem:[#allocation2 + $0x30] sm:$0xf]
    %v166 = vld [vmem:[#allocation2 + $0x34] sm:$0xf]
    %v167 = vld [vmem:[#allocation2 + $0x38] sm:$0xf]
    %v168 = vld [vmem:[#allocation2 + $0x3c] sm:$0xf]
    %v169 = vld [vmem:[#allocation2 + $0x40] sm:$0xf]
    %v170 = vld [vmem:[#allocation2 + $0x44] sm:$0xf]
    %v171 = vld [vmem:[#allocation2 + $0x48] sm:$0xf]
    %v172 = vld [vmem:[#allocation2 + $0x4c] sm:$0xf]
    %v173 = vld [vmem:[#allocation2 + $0x50] sm:$0xf]
    %v174 = vld [vmem:[#allocation2 + $0x54] sm:$0xf]
    %v175 = vld [vmem:[#allocation2 + $0x58] sm:$0xf]
    %v176 = vld [vmem:[#allocation2 + $0x5c] sm:$0xf]
    %v177 = vld [vmem:[#allocation2 + $0x60] sm:$0xf]
    %v178 = vld [vmem:[#allocation2 + $0x64] sm:$0xf]
    %v179 = vld [vmem:[#allocation2 + $0x68] sm:$0xf]
    %v180 = vld [vmem:[#allocation2 + $0x6c] sm:$0xf]
    %v181 = vld [vmem:[#allocation2 + $0x70] sm:$0xf]
    %v182 = vld [vmem:[#allocation2 + $0x74] sm:$0xf]
    %v183 = vld [vmem:[#allocation2 + $0x78] sm:$0xf]
    %v184 = vld [vmem:[#allocation2 + $0x7c] sm:$0xf]
    %v185 = vperm.slane %v127, 0
    %v218 = vunpack.c.l.b16 %v153
    %v219 = vunpack.c.l.b16 %v154
    %v220 = vunpack.c.l.b16 %v155
    %v221 = vunpack.c.l.b16 %v156
    %v222 = vunpack.c.l.b16 %v157
    %v223 = vunpack.c.l.b16 %v158
    %v224 = vunpack.c.l.b16 %v159
    %v225 = vunpack.c.l.b16 %v160
    %v226 = vunpack.c.l.b16 %v161
    %v227 = vunpack.c.l.b16 %v162
    %v228 = vunpack.c.l.b16 %v163
    %v229 = vunpack.c.l.b16 %v164
    %v230 = vunpack.c.l.b16 %v165
    %v231 = vunpack.c.l.b16 %v166
    %v232 = vunpack.c.l.b16 %v167
    %v233 = vunpack.c.l.b16 %v168
    %v234 = vunpack.c.l.b16 %v169
    %v235 = vunpack.c.l.b16 %v170
    %v236 = vunpack.c.l.b16 %v171
    %v237 = vunpack.c.l.b16 %v172
    %v238 = vunpack.c.l.b16 %v173
    %v239 = vunpack.c.l.b16 %v174
    %v240 = vunpack.c.l.b16 %v175
    %v241 = vunpack.c.l.b16 %v176
    %v242 = vunpack.c.l.b16 %v177
    %v243 = vunpack.c.l.b16 %v178
    %v244 = vunpack.c.l.b16 %v179
    %v245 = vunpack.c.l.b16 %v180
    %v246 = vunpack.c.l.b16 %v181
    %v247 = vunpack.c.l.b16 %v182
    %v248 = vunpack.c.l.b16 %v183
    %v249 = vunpack.c.l.b16 %v184
    %v250 = vpack.c.b16 %v219, %v218
    %v251 = vpack.c.b16 %v221, %v220
    %v252 = vpack.c.b16 %v223, %v222
    %v253 = vpack.c.b16 %v225, %v224
    %v254 = vpack.c.b16 %v227, %v226
    %v255 = vpack.c.b16 %v229, %v228
    %v256 = vpack.c.b16 %v231, %v230
    %v257 = vpack.c.b16 %v233, %v232
    %v258 = vpack.c.b16 %v235, %v234
    %v259 = vpack.c.b16 %v237, %v236
    %v260 = vpack.c.b16 %v239, %v238
    %v261 = vpack.c.b16 %v241, %v240
    %v262 = vpack.c.b16 %v243, %v242
    %v263 = vpack.c.b16 %v245, %v244
    %v264 = vpack.c.b16 %v247, %v246
    %v265 = vpack.c.b16 %v249, %v248
    %282 = vmatpush.bf16.msra.mxu0 %v257
    %283 = vmatpush.bf16.msra.mxu0 %v256
    %284 = vmatpush.bf16.msra.mxu0 %v255
    %285 = vmatpush.bf16.msra.mxu0 %v254
    %286 = vmatpush.bf16.msra.mxu0 %v253
    %287 = vmatpush.bf16.msra.mxu0 %v252
    %288 = vmatpush.bf16.msra.mxu0 %v251
    %289 = vmatpush.bf16.msra.mxu0 %v250
    %290 = vmatmul.bf16.gmra.mxu0 %v151
    %v291 = vpop.f32.mrf.mxu0
    %v292 = vadd.f32 %v185, %v291
    %v293 = vpop.f32.mrf.mxu0
    %294 = vdwg.mxu0
    %295 = vmatpush.bf16.msra.mxu0 %v265
    %296 = vmatpush.bf16.msra.mxu0 %v264
    %297 = vmatpush.bf16.msra.mxu0 %v263
    %298 = vmatpush.bf16.msra.mxu0 %v262
    %299 = vmatpush.bf16.msra.mxu0 %v261
    %300 = vmatpush.bf16.msra.mxu0 %v260
    %301 = vmatpush.bf16.msra.mxu0 %v259
    %302 = vmatpush.bf16.msra.mxu0 %v258
    %303 = vmatmul.bf16.gmra.mxu0 %v152
    %v304 = vpop.f32.mrf.mxu0
    %v305 = vadd.f32 %v292, %v304
    %v306 = vpop.f32.mrf.mxu0
    %307 = vdwg.mxu0
    %v308 = vld [vmem:[%s1] sm:$0xff]
    %s309 = scalar_lea.vmem [#allocation10], 2
    %v310 = vld [vmem:[%s309] ss:$8 sm:$0x3]
    %s311 = scalar_lea.vmem [#allocation10], 5
    %v312 = vld [vmem:[%s311] ss:$8 sm:$0x3]
    %s313 = scalar_lea.vmem [#allocation10], 16
    %v314 = vld [vmem:[%s313] ss:$8 sm:$0x3]
    %v315 = vld [vmem:[#allocation11 + $0x1] sm:$0x1]
    %v316 = vld [vmem:[#allocation11 + $0x4] sm:$0x1]
    %v317 = vld [vmem:[#allocation11 + $0x7] sm:$0x1]
    %v318 = vadd.f32 %v308, %v305
    %v319 = vpack.c.bf16 %v318, %v318
    %v320 = vld [vmem:[#allocation5] sm:$0xff]
    %v321 = vld [vmem:[#allocation5 + $0x8] sm:$0xff]
    %v322 = vld [vmem:[#allocation5 + $0x10] sm:$0xff]
    %v323 = vld [vmem:[#allocation5 + $0x18] sm:$0xff]
    %v324 = vld [vmem:[#allocation5 + $0x20] sm:$0xff]
    %v325 = vld [vmem:[#allocation5 + $0x28] sm:$0xff]
    %v326 = vld [vmem:[#allocation5 + $0x30] sm:$0xff]
    %v327 = vld [vmem:[#allocation5 + $0x38] sm:$0xff]
    %v328 = vld [vmem:[#allocation5 + $0x40] sm:$0xff]
    %v329 = vld [vmem:[#allocation5 + $0x48] sm:$0xff]
    %v330 = vld [vmem:[#allocation5 + $0x50] sm:$0xff]
    %v331 = vld [vmem:[#allocation5 + $0x58] sm:$0xff]
    %v332 = vld [vmem:[#allocation5 + $0x60] sm:$0xff]
    %v333 = vld [vmem:[#allocation5 + $0x68] sm:$0xff]
    %v334 = vld [vmem:[#allocation5 + $0x70] sm:$0xff]
    %v335 = vld [vmem:[#allocation5 + $0x78] sm:$0xff]
    %v337 = vperm.slane %v310, 0
    %v338 = vperm.slane %v310, 1
    %v357 = vunpack.c.l.b16 %v320
    %v358 = vunpack.c.h.b16 %v320
    %v359 = vunpack.c.l.b16 %v321
    %v360 = vunpack.c.h.b16 %v321
    %v361 = vunpack.c.l.b16 %v322
    %v362 = vunpack.c.h.b16 %v322
    %v363 = vunpack.c.l.b16 %v323
    %v364 = vunpack.c.h.b16 %v323
    %v365 = vunpack.c.l.b16 %v324
    %v366 = vunpack.c.h.b16 %v324
    %v367 = vunpack.c.l.b16 %v325
    %v368 = vunpack.c.h.b16 %v325
    %v369 = vunpack.c.l.b16 %v326
    %v370 = vunpack.c.h.b16 %v326
    %v371 = vunpack.c.l.b16 %v327
    %v372 = vunpack.c.h.b16 %v327
    %v373 = vunpack.c.l.b16 %v328
    %v374 = vunpack.c.h.b16 %v328
    %v375 = vunpack.c.l.b16 %v329
    %v376 = vunpack.c.h.b16 %v329
    %v377 = vunpack.c.l.b16 %v330
    %v378 = vunpack.c.h.b16 %v330
    %v379 = vunpack.c.l.b16 %v331
    %v380 = vunpack.c.h.b16 %v331
    %v381 = vunpack.c.l.b16 %v332
    %v382 = vunpack.c.h.b16 %v332
    %v383 = vunpack.c.l.b16 %v333
    %v384 = vunpack.c.h.b16 %v333
    %v385 = vunpack.c.l.b16 %v334
    %v386 = vunpack.c.h.b16 %v334
    %v387 = vunpack.c.l.b16 %v335
    %v388 = vunpack.c.h.b16 %v335
    %v389 = vpack.c.b16 %v359, %v357
    %v390 = vpack.c.b16 %v360, %v358
    %v391 = vpack.c.b16 %v363, %v361
    %v392 = vpack.c.b16 %v364, %v362
    %v393 = vpack.c.b16 %v367, %v365
    %v394 = vpack.c.b16 %v368, %v366
    %v395 = vpack.c.b16 %v371, %v369
    %v396 = vpack.c.b16 %v372, %v370
    %v397 = vpack.c.b16 %v375, %v373
    %v398 = vpack.c.b16 %v376, %v374
    %v399 = vpack.c.b16 %v379, %v377
    %v400 = vpack.c.b16 %v380, %v378
    %v401 = vpack.c.b16 %v383, %v381
    %v402 = vpack.c.b16 %v384, %v382
    %v403 = vpack.c.b16 %v387, %v385
    %v404 = vpack.c.b16 %v388, %v386
    %421 = vmatpush.bf16.msra.mxu0 %v403
    %422 = vmatpush.bf16.msra.mxu0 %v401
    %423 = vmatpush.bf16.msra.mxu0 %v399
    %424 = vmatpush.bf16.msra.mxu0 %v397
    %425 = vmatpush.bf16.msra.mxu0 %v395
    %426 = vmatpush.bf16.msra.mxu0 %v393
    %427 = vmatpush.bf16.msra.mxu0 %v391
    %428 = vmatpush.bf16.msra.mxu0 %v389
    %429 = vmatmul.bf16.gmra.mxu0 %v319
    %v430 = vpop.f32.mrf.mxu0
    %v431 = vadd.f32 %v337, %v430
    %v432 = vpop.f32.mrf.mxu0
    %433 = vdwg.mxu0
    %434 = vmatpush.bf16.msra.mxu0 %v404
    %435 = vmatpush.bf16.msra.mxu0 %v402
    %436 = vmatpush.bf16.msra.mxu0 %v400
    %437 = vmatpush.bf16.msra.mxu0 %v398
    %438 = vmatpush.bf16.msra.mxu0 %v396
    %439 = vmatpush.bf16.msra.mxu0 %v394
    %440 = vmatpush.bf16.msra.mxu0 %v392
    %441 = vmatpush.bf16.msra.mxu0 %v390
    %442 = vmatmul.bf16.gmra.mxu0 %v319
    %v443 = vpop.f32.mrf.mxu0
    %v444 = vadd.f32 %v338, %v443
    %v445 = vpop.f32.mrf.mxu0
    %446 = vdwg.mxu0
    %v447 = vadd.f32 %v431, %v444
    %448 = vadd.xlane.f32.xlu0 %v447
    %v449 = vpop.xlane.xlu0 %448
    %v450 = vmul.f32 %v431, %v431
    %v451 = vmul.f32 %v444, %v444
    %v452 = vadd.f32 %v450, %v451
    %453 = vadd.xlane.f32.xlu0 %v452
    %v454 = vpop.xlane.xlu0 %453
    %v455 = vmul.f32 %v449, 0.00390625
    %v456 = vmul.f32 %v454, 0.00390625
    %v457 = vmul.f32 %v455, %v455
    %v458 = vsub.f32 %v456, %v457
    %v459 = vmax.f32 %v458, 0.0
    %v460 = vsub.f32 %v431, %v455
    %v461 = vsub.f32 %v444, %v455
    %v462 = vadd.f32 %v459, 1e-05
    %v463 = vrsqrt.pop %v462
    %v464 = vmul.f32 %v463, %v462
    %v465 = vmul.f32 %v464, %v463
    %v466 = vmul.f32 0.5, %v465
    %v467 = vsub.f32 1.5, %v466
    %v468 = vmul.f32 %v463, %v467
    %vm469 = vweird.f32 %v462
    %vm470 = vweird.f32 %v463
    %vm471 = vmor %vm469, %vm470
    %v472 = vsel %vm471, %v463, %v468
    %v473 = vmul.f32 %v460, %v472
    %v474 = vmul.f32 %v461, %v472
    %v476 = vperm.slane %v312, 0
    %v477 = vperm.slane %v312, 1
    %v480 = vmul.f32 %v473, %v476
    %v481 = vmul.f32 %v474, %v477
    %v483 = vperm.slane %v314, 0
    %v484 = vperm.slane %v314, 1
    %v487 = vadd.f32 %v480, %v483
    %v488 = vadd.f32 %v481, %v484
    %v489 = vmax.f32 %v487, 0.0
    %v490 = vmax.f32 %v488, 0.0
    %v491 = vpack.c.bf16 %v489, %v489
    %v492 = vpack.c.bf16 %v490, %v490
    %v493 = vld [vmem:[#allocation7] sm:$0xf]
    %v494 = vld [vmem:[#allocation7 + $0x4] sm:$0xf]
    %v495 = vld [vmem:[#allocation7 + $0x8] sm:$0xf]
    %v496 = vld [vmem:[#allocation7 + $0xc] sm:$0xf]
    %v497 = vld [vmem:[#allocation7 + $0x10] sm:$0xf]
    %v498 = vld [vmem:[#allocation7 + $0x14] sm:$0xf]
    %v499 = vld [vmem:[#allocation7 + $0x18] sm:$0xf]
    %v500 = vld [vmem:[#allocation7 + $0x1c] sm:$0xf]
    %v501 = vld [vmem:[#allocation7 + $0x20] sm:$0xf]
    %v502 = vld [vmem:[#allocation7 + $0x24] sm:$0xf]
    %v503 = vld [vmem:[#allocation7 + $0x28] sm:$0xf]
    %v504 = vld [vmem:[#allocation7 + $0x2c] sm:$0xf]
    %v505 = vld [vmem:[#allocation7 + $0x30] sm:$0xf]
    %v506 = vld [vmem:[#allocation7 + $0x34] sm:$0xf]
    %v507 = vld [vmem:[#allocation7 + $0x38] sm:$0xf]
    %v508 = vld [vmem:[#allocation7 + $0x3c] sm:$0xf]
    %v509 = vld [vmem:[#allocation7 + $0x40] sm:$0xf]
    %v510 = vld [vmem:[#allocation7 + $0x44] sm:$0xf]
    %v511 = vld [vmem:[#allocation7 + $0x48] sm:$0xf]
    %v512 = vld [vmem:[#allocation7 + $0x4c] sm:$0xf]
    %v513 = vld [vmem:[#allocation7 + $0x50] sm:$0xf]
    %v514 = vld [vmem:[#allocation7 + $0x54] sm:$0xf]
    %v515 = vld [vmem:[#allocation7 + $0x58] sm:$0xf]
    %v516 = vld [vmem:[#allocation7 + $0x5c] sm:$0xf]
    %v517 = vld [vmem:[#allocation7 + $0x60] sm:$0xf]
    %v518 = vld [vmem:[#allocation7 + $0x64] sm:$0xf]
    %v519 = vld [vmem:[#allocation7 + $0x68] sm:$0xf]
    %v520 = vld [vmem:[#allocation7 + $0x6c] sm:$0xf]
    %v521 = vld [vmem:[#allocation7 + $0x70] sm:$0xf]
    %v522 = vld [vmem:[#allocation7 + $0x74] sm:$0xf]
    %v523 = vld [vmem:[#allocation7 + $0x78] sm:$0xf]
    %v524 = vld [vmem:[#allocation7 + $0x7c] sm:$0xf]
    %v525 = vperm.slane %v315, 0
    %v558 = vunpack.c.l.b16 %v493
    %v559 = vunpack.c.l.b16 %v494
    %v560 = vunpack.c.l.b16 %v495
    %v561 = vunpack.c.l.b16 %v496
    %v562 = vunpack.c.l.b16 %v497
    %v563 = vunpack.c.l.b16 %v498
    %v564 = vunpack.c.l.b16 %v499
    %v565 = vunpack.c.l.b16 %v500
    %v566 = vunpack.c.l.b16 %v501
    %v567 = vunpack.c.l.b16 %v502
    %v568 = vunpack.c.l.b16 %v503
    %v569 = vunpack.c.l.b16 %v504
    %v570 = vunpack.c.l.b16 %v505
    %v571 = vunpack.c.l.b16 %v506
    %v572 = vunpack.c.l.b16 %v507
    %v573 = vunpack.c.l.b16 %v508
    %v574 = vunpack.c.l.b16 %v509
    %v575 = vunpack.c.l.b16 %v510
    %v576 = vunpack.c.l.b16 %v511
    %v577 = vunpack.c.l.b16 %v512
    %v578 = vunpack.c.l.b16 %v513
    %v579 = vunpack.c.l.b16 %v514
    %v580 = vunpack.c.l.b16 %v515
    %v581 = vunpack.c.l.b16 %v516
    %v582 = vunpack.c.l.b16 %v517
    %v583 = vunpack.c.l.b16 %v518
    %v584 = vunpack.c.l.b16 %v519
    %v585 = vunpack.c.l.b16 %v520
    %v586 = vunpack.c.l.b16 %v521
    %v587 = vunpack.c.l.b16 %v522
    %v588 = vunpack.c.l.b16 %v523
    %v589 = vunpack.c.l.b16 %v524
    %v590 = vpack.c.b16 %v559, %v558
    %v591 = vpack.c.b16 %v561, %v560
    %v592 = vpack.c.b16 %v563, %v562
    %v593 = vpack.c.b16 %v565, %v564
    %v594 = vpack.c.b16 %v567, %v566
    %v595 = vpack.c.b16 %v569, %v568
    %v596 = vpack.c.b16 %v571, %v570
    %v597 = vpack.c.b16 %v573, %v572
    %v598 = vpack.c.b16 %v575, %v574
    %v599 = vpack.c.b16 %v577, %v576
    %v600 = vpack.c.b16 %v579, %v578
    %v601 = vpack.c.b16 %v581, %v580
    %v602 = vpack.c.b16 %v583, %v582
    %v603 = vpack.c.b16 %v585, %v584
    %v604 = vpack.c.b16 %v587, %v586
    %v605 = vpack.c.b16 %v589, %v588
    %622 = vmatpush.bf16.msra.mxu0 %v597
    %623 = vmatpush.bf16.msra.mxu0 %v596
    %624 = vmatpush.bf16.msra.mxu0 %v595
    %625 = vmatpush.bf16.msra.mxu0 %v594
    %626 = vmatpush.bf16.msra.mxu0 %v593
    %627 = vmatpush.bf16.msra.mxu0 %v592
    %628 = vmatpush.bf16.msra.mxu0 %v591
    %629 = vmatpush.bf16.msra.mxu0 %v590
    %630 = vmatmul.bf16.gmra.mxu0 %v491
    %v631 = vpop.f32.mrf.mxu0
    %v632 = vadd.f32 %v525, %v631
    %v633 = vpop.f32.mrf.mxu0
    %634 = vdwg.mxu0
    %635 = vmatpush.bf16.msra.mxu0 %v605
    %636 = vmatpush.bf16.msra.mxu0 %v604
    %637 = vmatpush.bf16.msra.mxu0 %v603
    %638 = vmatpush.bf16.msra.mxu0 %v602
    %639 = vmatpush.bf16.msra.mxu0 %v601
    %640 = vmatpush.bf16.msra.mxu0 %v600
    %641 = vmatpush.bf16.msra.mxu0 %v599
    %642 = vmatpush.bf16.msra.mxu0 %v598
    %643 = vmatmul.bf16.gmra.mxu0 %v492
    %v644 = vpop.f32.mrf.mxu0
    %v645 = vadd.f32 %v632, %v644
    %v646 = vpop.f32.mrf.mxu0
    %647 = vdwg.mxu0
    %648 = vadd.xlane.f32.xlu0 %v645
    %v649 = vpop.xlane.xlu0 %648
    %v650 = vmul.f32 %v645, %v645
    %651 = vadd.xlane.f32.xlu0 %v650
    %v652 = vpop.xlane.xlu0 %651
    %v653 = vmul.f32 %v649, 0.0078125
    %v654 = vmul.f32 %v652, 0.0078125
    %v655 = vmul.f32 %v653, %v653
    %v656 = vsub.f32 %v654, %v655
    %v657 = vmax.f32 %v656, 0.0
    %v658 = vsub.f32 %v645, %v653
    %v659 = vadd.f32 %v657, 1e-05
    %v660 = vrsqrt.pop %v659
    %v661 = vmul.f32 %v660, %v659
    %v662 = vmul.f32 %v661, %v660
    %v663 = vmul.f32 0.5, %v662
    %v664 = vsub.f32 1.5, %v663
    %v665 = vmul.f32 %v660, %v664
    %vm666 = vweird.f32 %v659
    %vm667 = vweird.f32 %v660
    %vm668 = vmor %vm666, %vm667
    %v669 = vsel %vm668, %v660, %v665
    %v670 = vmul.f32 %v658, %v669
    %v671 = vperm.slane %v316, 0
    %v672 = vmul.f32 %v670, %v671
    %v673 = vperm.slane %v317, 0
    %v674 = vadd.f32 %v672, %v673
    %v675 = vadd.f32 %v674, %v308
    %s676 = scalar_lea.vmem [#allocation10], 3
    %v677 = vld [vmem:[%s676] ss:$8 sm:$0x3]
    %s678 = scalar_lea.vmem [#allocation10], 6
    %v679 = vld [vmem:[%s678] ss:$8 sm:$0x3]
    %s680 = scalar_lea.vmem [#allocation10], 17
    %v681 = vld [vmem:[%s680] ss:$8 sm:$0x3]
    %v682 = vld [vmem:[#allocation11 + $0x2] sm:$0x1]
    %v683 = vld [vmem:[#allocation11 + $0x5] sm:$0x1]
    %v684 = vld [vmem:[#allocation11 + $0x8] sm:$0x1]
    %v685 = vadd.f32 %v675, %v305
    %v686 = vpack.c.bf16 %v685, %v685
    %s687 = scalar_lea.vmem [#allocation5], 128
    %v688 = vld [vmem:[%s687] sm:$0xff]
    %v689 = vld [vmem:[%s687 + $0x8] sm:$0xff]
    %v690 = vld [vmem:[%s687 + $0x10] sm:$0xff]
    %v691 = vld [vmem:[%s687 + $0x18] sm:$0xff]
    %v692 = vld [vmem:[%s687 + $0x20] sm:$0xff]
    %v693 = vld [vmem:[%s687 + $0x28] sm:$0xff]
    %v694 = vld [vmem:[%s687 + $0x30] sm:$0xff]
    %v695 = vld [vmem:[%s687 + $0x38] sm:$0xff]
    %v696 = vld [vmem:[%s687 + $0x40] sm:$0xff]
    %v697 = vld [vmem:[%s687 + $0x48] sm:$0xff]
    %v698 = vld [vmem:[%s687 + $0x50] sm:$0xff]
    %v699 = vld [vmem:[%s687 + $0x58] sm:$0xff]
    %v700 = vld [vmem:[%s687 + $0x60] sm:$0xff]
    %v701 = vld [vmem:[%s687 + $0x68] sm:$0xff]
    %v702 = vld [vmem:[%s687 + $0x70] sm:$0xff]
    %v703 = vld [vmem:[%s687 + $0x78] sm:$0xff]
    %v705 = vperm.slane %v677, 0
    %v706 = vperm.slane %v677, 1
    %v725 = vunpack.c.l.b16 %v688
    %v726 = vunpack.c.h.b16 %v688
    %v727 = vunpack.c.l.b16 %v689
    %v728 = vunpack.c.h.b16 %v689
    %v729 = vunpack.c.l.b16 %v690
    %v730 = vunpack.c.h.b16 %v690
    %v731 = vunpack.c.l.b16 %v691
    %v732 = vunpack.c.h.b16 %v691
    %v733 = vunpack.c.l.b16 %v692
    %v734 = vunpack.c.h.b16 %v692
    %v735 = vunpack.c.l.b16 %v693
    %v736 = vunpack.c.h.b16 %v693
    %v737 = vunpack.c.l.b16 %v694
    %v738 = vunpack.c.h.b16 %v694
    %v739 = vunpack.c.l.b16 %v695
    %v740 = vunpack.c.h.b16 %v695
    %v741 = vunpack.c.l.b16 %v696
    %v742 = vunpack.c.h.b16 %v696
    %v743 = vunpack.c.l.b16 %v697
    %v744 = vunpack.c.h.b16 %v697
    %v745 = vunpack.c.l.b16 %v698
    %v746 = vunpack.c.h.b16 %v698
    %v747 = vunpack.c.l.b16 %v699
    %v748 = vunpack.c.h.b16 %v699
    %v749 = vunpack.c.l.b16 %v700
    %v750 = vunpack.c.h.b16 %v700
    %v751 = vunpack.c.l.b16 %v701
    %v752 = vunpack.c.h.b16 %v701
    %v753 = vunpack.c.l.b16 %v702
    %v754 = vunpack.c.h.b16 %v702
    %v755 = vunpack.c.l.b16 %v703
    %v756 = vunpack.c.h.b16 %v703
    %v757 = vpack.c.b16 %v727, %v725
    %v758 = vpack.c.b16 %v728, %v726
    %v759 = vpack.c.b16 %v731, %v729
    %v760 = vpack.c.b16 %v732, %v730
    %v761 = vpack.c.b16 %v735, %v733
    %v762 = vpack.c.b16 %v736, %v734
    %v763 = vpack.c.b16 %v739, %v737
    %v764 = vpack.c.b16 %v740, %v738
    %v765 = vpack.c.b16 %v743, %v741
    %v766 = vpack.c.b16 %v744, %v742
    %v767 = vpack.c.b16 %v747, %v745
    %v768 = vpack.c.b16 %v748, %v746
    %v769 = vpack.c.b16 %v751, %v749
    %v770 = vpack.c.b16 %v752, %v750
    %v771 = vpack.c.b16 %v755, %v753
    %v772 = vpack.c.b16 %v756, %v754
    %789 = vmatpush.bf16.msra.mxu0 %v771
    %790 = vmatpush.bf16.msra.mxu0 %v769
    %791 = vmatpush.bf16.msra.mxu0 %v767
    %792 = vmatpush.bf16.msra.mxu0 %v765
    %793 = vmatpush.bf16.msra.mxu0 %v763
    %794 = vmatpush.bf16.msra.mxu0 %v761
    %795 = vmatpush.bf16.msra.mxu0 %v759
    %796 = vmatpush.bf16.msra.mxu0 %v757
    %797 = vmatmul.bf16.gmra.mxu0 %v686
    %v798 = vpop.f32.mrf.mxu0
    %v799 = vadd.f32 %v705, %v798
    %v800 = vpop.f32.mrf.mxu0
    %801 = vdwg.mxu0
    %802 = vmatpush.bf16.msra.mxu0 %v772
    %803 = vmatpush.bf16.msra.mxu0 %v770
    %804 = vmatpush.bf16.msra.mxu0 %v768
    %805 = vmatpush.bf16.msra.mxu0 %v766
    %806 = vmatpush.bf16.msra.mxu0 %v764
    %807 = vmatpush.bf16.msra.mxu0 %v762
    %808 = vmatpush.bf16.msra.mxu0 %v760
    %809 = vmatpush.bf16.msra.mxu0 %v758
    %810 = vmatmul.bf16.gmra.mxu0 %v686
    %v811 = vpop.f32.mrf.mxu0
    %v812 = vadd.f32 %v706, %v811
    %v813 = vpop.f32.mrf.mxu0
    %814 = vdwg.mxu0
    %v815 = vadd.f32 %v799, %v812
    %816 = vadd.xlane.f32.xlu0 %v815
    %v817 = vpop.xlane.xlu0 %816
    %v818 = vmul.f32 %v799, %v799
    %v819 = vmul.f32 %v812, %v812
    %v820 = vadd.f32 %v818, %v819
    %821 = vadd.xlane.f32.xlu0 %v820
    %v822 = vpop.xlane.xlu0 %821
    %v823 = vmul.f32 %v817, 0.00390625
    %v824 = vmul.f32 %v822, 0.00390625
    %v825 = vmul.f32 %v823, %v823
    %v826 = vsub.f32 %v824, %v825
    %v827 = vmax.f32 %v826, 0.0
    %v828 = vsub.f32 %v799, %v823
    %v829 = vsub.f32 %v812, %v823
    %v830 = vadd.f32 %v827, 1e-05
    %v831 = vrsqrt.pop %v830
    %v832 = vmul.f32 %v831, %v830
    %v833 = vmul.f32 %v832, %v831
    %v834 = vmul.f32 0.5, %v833
    %v835 = vsub.f32 1.5, %v834
    %v836 = vmul.f32 %v831, %v835
    %vm837 = vweird.f32 %v830
    %vm838 = vweird.f32 %v831
    %vm839 = vmor %vm837, %vm838
    %v840 = vsel %vm839, %v831, %v836
    %v841 = vmul.f32 %v828, %v840
    %v842 = vmul.f32 %v829, %v840
    %v844 = vperm.slane %v679, 0
    %v845 = vperm.slane %v679, 1
    %v848 = vmul.f32 %v841, %v844
    %v849 = vmul.f32 %v842, %v845
    %v851 = vperm.slane %v681, 0
    %v852 = vperm.slane %v681, 1
    %v855 = vadd.f32 %v848, %v851
    %v856 = vadd.f32 %v849, %v852
    %v857 = vmax.f32 %v855, 0.0
    %v858 = vmax.f32 %v856, 0.0
    %v859 = vpack.c.bf16 %v857, %v857
    %v860 = vpack.c.bf16 %v858, %v858
    %s861 = scalar_lea.vmem [#allocation7], 128
    %v862 = vld [vmem:[%s861] sm:$0xf]
    %v863 = vld [vmem:[%s861 + $0x4] sm:$0xf]
    %v864 = vld [vmem:[%s861 + $0x8] sm:$0xf]
    %v865 = vld [vmem:[%s861 + $0xc] sm:$0xf]
    %v866 = vld [vmem:[%s861 + $0x10] sm:$0xf]
    %v867 = vld [vmem:[%s861 + $0x14] sm:$0xf]
    %v868 = vld [vmem:[%s861 + $0x18] sm:$0xf]
    %v869 = vld [vmem:[%s861 + $0x1c] sm:$0xf]
    %v870 = vld [vmem:[%s861 + $0x20] sm:$0xf]
    %v871 = vld [vmem:[%s861 + $0x24] sm:$0xf]
    %v872 = vld [vmem:[%s861 + $0x28] sm:$0xf]
    %v873 = vld [vmem:[%s861 + $0x2c] sm:$0xf]
    %v874 = vld [vmem:[%s861 + $0x30] sm:$0xf]
    %v875 = vld [vmem:[%s861 + $0x34] sm:$0xf]
    %v876 = vld [vmem:[%s861 + $0x38] sm:$0xf]
    %v877 = vld [vmem:[%s861 + $0x3c] sm:$0xf]
    %v878 = vld [vmem:[%s861 + $0x40] sm:$0xf]
    %v879 = vld [vmem:[%s861 + $0x44] sm:$0xf]
    %v880 = vld [vmem:[%s861 + $0x48] sm:$0xf]
    %v881 = vld [vmem:[%s861 + $0x4c] sm:$0xf]
    %v882 = vld [vmem:[%s861 + $0x50] sm:$0xf]
    %v883 = vld [vmem:[%s861 + $0x54] sm:$0xf]
    %v884 = vld [vmem:[%s861 + $0x58] sm:$0xf]
    %v885 = vld [vmem:[%s861 + $0x5c] sm:$0xf]
    %v886 = vld [vmem:[%s861 + $0x60] sm:$0xf]
    %v887 = vld [vmem:[%s861 + $0x64] sm:$0xf]
    %v888 = vld [vmem:[%s861 + $0x68] sm:$0xf]
    %v889 = vld [vmem:[%s861 + $0x6c] sm:$0xf]
    %v890 = vld [vmem:[%s861 + $0x70] sm:$0xf]
    %v891 = vld [vmem:[%s861 + $0x74] sm:$0xf]
    %v892 = vld [vmem:[%s861 + $0x78] sm:$0xf]
    %v893 = vld [vmem:[%s861 + $0x7c] sm:$0xf]
    %v894 = vperm.slane %v682, 0
    %v927 = vunpack.c.l.b16 %v862
    %v928 = vunpack.c.l.b16 %v863
    %v929 = vunpack.c.l.b16 %v864
    %v930 = vunpack.c.l.b16 %v865
    %v931 = vunpack.c.l.b16 %v866
    %v932 = vunpack.c.l.b16 %v867
    %v933 = vunpack.c.l.b16 %v868
    %v934 = vunpack.c.l.b16 %v869
    %v935 = vunpack.c.l.b16 %v870
    %v936 = vunpack.c.l.b16 %v871
    %v937 = vunpack.c.l.b16 %v872
    %v938 = vunpack.c.l.b16 %v873
    %v939 = vunpack.c.l.b16 %v874
    %v940 = vunpack.c.l.b16 %v875
    %v941 = vunpack.c.l.b16 %v876
    %v942 = vunpack.c.l.b16 %v877
    %v943 = vunpack.c.l.b16 %v878
    %v944 = vunpack.c.l.b16 %v879
    %v945 = vunpack.c.l.b16 %v880
    %v946 = vunpack.c.l.b16 %v881
    %v947 = vunpack.c.l.b16 %v882
    %v948 = vunpack.c.l.b16 %v883
    %v949 = vunpack.c.l.b16 %v884
    %v950 = vunpack.c.l.b16 %v885
    %v951 = vunpack.c.l.b16 %v886
    %v952 = vunpack.c.l.b16 %v887
    %v953 = vunpack.c.l.b16 %v888
    %v954 = vunpack.c.l.b16 %v889
    %v955 = vunpack.c.l.b16 %v890
    %v956 = vunpack.c.l.b16 %v891
    %v957 = vunpack.c.l.b16 %v892
    %v958 = vunpack.c.l.b16 %v893
    %v959 = vpack.c.b16 %v928, %v927
    %v960 = vpack.c.b16 %v930, %v929
    %v961 = vpack.c.b16 %v932, %v931
    %v962 = vpack.c.b16 %v934, %v933
    %v963 = vpack.c.b16 %v936, %v935
    %v964 = vpack.c.b16 %v938, %v937
    %v965 = vpack.c.b16 %v940, %v939
    %v966 = vpack.c.b16 %v942, %v941
    %v967 = vpack.c.b16 %v944, %v943
    %v968 = vpack.c.b16 %v946, %v945
    %v969 = vpack.c.b16 %v948, %v947
    %v970 = vpack.c.b16 %v950, %v949
    %v971 = vpack.c.b16 %v952, %v951
    %v972 = vpack.c.b16 %v954, %v953
    %v973 = vpack.c.b16 %v956, %v955
    %v974 = vpack.c.b16 %v958, %v957
    %991 = vmatpush.bf16.msra.mxu0 %v966
    %992 = vmatpush.bf16.msra.mxu0 %v965
    %993 = vmatpush.bf16.msra.mxu0 %v964
    %994 = vmatpush.bf16.msra.mxu0 %v963
    %995 = vmatpush.bf16.msra.mxu0 %v962
    %996 = vmatpush.bf16.msra.mxu0 %v961
    %997 = vmatpush.bf16.msra.mxu0 %v960
    %998 = vmatpush.bf16.msra.mxu0 %v959
    %999 = vmatmul.bf16.gmra.mxu0 %v859
    %v1000 = vpop.f32.mrf.mxu0
    %v1001 = vadd.f32 %v894, %v1000
    %v1002 = vpop.f32.mrf.mxu0
    %1003 = vdwg.mxu0
    %1004 = vmatpush.bf16.msra.mxu0 %v974
    %1005 = vmatpush.bf16.msra.mxu0 %v973
    %1006 = vmatpush.bf16.msra.mxu0 %v972
    %1007 = vmatpush.bf16.msra.mxu0 %v971
    %1008 = vmatpush.bf16.msra.mxu0 %v970
    %1009 = vmatpush.bf16.msra.mxu0 %v969
    %1010 = vmatpush.bf16.msra.mxu0 %v968
    %1011 = vmatpush.bf16.msra.mxu0 %v967
    %1012 = vmatmul.bf16.gmra.mxu0 %v860
    %v1013 = vpop.f32.mrf.mxu0
    %v1014 = vadd.f32 %v1001, %v1013
    %v1015 = vpop.f32.mrf.mxu0
    %1016 = vdwg.mxu0
    %1017 = vadd.xlane.f32.xlu0 %v1014
    %v1018 = vpop.xlane.xlu0 %1017
    %v1019 = vmul.f32 %v1014, %v1014
    %1020 = vadd.xlane.f32.xlu0 %v1019
    %v1021 = vpop.xlane.xlu0 %1020
    %v1022 = vmul.f32 %v1018, 0.0078125
    %v1023 = vmul.f32 %v1021, 0.0078125
    %v1024 = vmul.f32 %v1022, %v1022
    %v1025 = vsub.f32 %v1023, %v1024
    %v1026 = vmax.f32 %v1025, 0.0
    %v1027 = vsub.f32 %v1014, %v1022
    %v1028 = vadd.f32 %v1026, 1e-05
    %v1029 = vrsqrt.pop %v1028
    %v1030 = vmul.f32 %v1029, %v1028
    %v1031 = vmul.f32 %v1030, %v1029
    %v1032 = vmul.f32 0.5, %v1031
    %v1033 = vsub.f32 1.5, %v1032
    %v1034 = vmul.f32 %v1029, %v1033
    %vm1035 = vweird.f32 %v1028
    %vm1036 = vweird.f32 %v1029
    %vm1037 = vmor %vm1035, %vm1036
    %v1038 = vsel %vm1037, %v1029, %v1034
    %v1039 = vmul.f32 %v1027, %v1038
    %v1040 = vperm.slane %v683, 0
    %v1041 = vmul.f32 %v1039, %v1040
    %v1042 = vperm.slane %v684, 0
    %v1043 = vadd.f32 %v1041, %v1042
    %v1044 = vadd.f32 %v1043, %v675
    %s1045 = scalar_lea.vmem [#allocation10], 4
    %v1046 = vld [vmem:[%s1045] ss:$8 sm:$0x3]
    %s1047 = scalar_lea.vmem [#allocation10], 7
    %v1048 = vld [vmem:[%s1047] ss:$8 sm:$0x3]
    %s1049 = scalar_lea.vmem [#allocation10], 18
    %v1050 = vld [vmem:[%s1049] ss:$8 sm:$0x3]
    %v1051 = vld [vmem:[#allocation11 + $0x3] sm:$0x1]
    %v1052 = vld [vmem:[#allocation11 + $0x6] sm:$0x1]
    %v1053 = vld [vmem:[#allocation11 + $0x9] sm:$0x1]
    %v1054 = vadd.f32 %v1044, %v305
    %v1055 = vpack.c.bf16 %v1054, %v1054
    %s1056 = scalar_lea.vmem [#allocation5], 256
    %v1057 = vld [vmem:[%s1056] sm:$0xff]
    %v1058 = vld [vmem:[%s1056 + $0x8] sm:$0xff]
    %v1059 = vld [vmem:[%s1056 + $0x10] sm:$0xff]
    %v1060 = vld [vmem:[%s1056 + $0x18] sm:$0xff]
    %v1061 = vld [vmem:[%s1056 + $0x20] sm:$0xff]
    %v1062 = vld [vmem:[%s1056 + $0x28] sm:$0xff]
    %v1063 = vld [vmem:[%s1056 + $0x30] sm:$0xff]
    %v1064 = vld [vmem:[%s1056 + $0x38] sm:$0xff]
    %v1065 = vld [vmem:[%s1056 + $0x40] sm:$0xff]
    %v1066 = vld [vmem:[%s1056 + $0x48] sm:$0xff]
    %v1067 = vld [vmem:[%s1056 + $0x50] sm:$0xff]
    %v1068 = vld [vmem:[%s1056 + $0x58] sm:$0xff]
    %v1069 = vld [vmem:[%s1056 + $0x60] sm:$0xff]
    %v1070 = vld [vmem:[%s1056 + $0x68] sm:$0xff]
    %v1071 = vld [vmem:[%s1056 + $0x70] sm:$0xff]
    %v1072 = vld [vmem:[%s1056 + $0x78] sm:$0xff]
    %v1074 = vperm.slane %v1046, 0
    %v1075 = vperm.slane %v1046, 1
    %v1094 = vunpack.c.l.b16 %v1057
    %v1095 = vunpack.c.h.b16 %v1057
    %v1096 = vunpack.c.l.b16 %v1058
    %v1097 = vunpack.c.h.b16 %v1058
    %v1098 = vunpack.c.l.b16 %v1059
    %v1099 = vunpack.c.h.b16 %v1059
    %v1100 = vunpack.c.l.b16 %v1060
    %v1101 = vunpack.c.h.b16 %v1060
    %v1102 = vunpack.c.l.b16 %v1061
    %v1103 = vunpack.c.h.b16 %v1061
    %v1104 = vunpack.c.l.b16 %v1062
    %v1105 = vunpack.c.h.b16 %v1062
    %v1106 = vunpack.c.l.b16 %v1063
    %v1107 = vunpack.c.h.b16 %v1063
    %v1108 = vunpack.c.l.b16 %v1064
    %v1109 = vunpack.c.h.b16 %v1064
    %v1110 = vunpack.c.l.b16 %v1065
    %v1111 = vunpack.c.h.b16 %v1065
    %v1112 = vunpack.c.l.b16 %v1066
    %v1113 = vunpack.c.h.b16 %v1066
    %v1114 = vunpack.c.l.b16 %v1067
    %v1115 = vunpack.c.h.b16 %v1067
    %v1116 = vunpack.c.l.b16 %v1068
    %v1117 = vunpack.c.h.b16 %v1068
    %v1118 = vunpack.c.l.b16 %v1069
    %v1119 = vunpack.c.h.b16 %v1069
    %v1120 = vunpack.c.l.b16 %v1070
    %v1121 = vunpack.c.h.b16 %v1070
    %v1122 = vunpack.c.l.b16 %v1071
    %v1123 = vunpack.c.h.b16 %v1071
    %v1124 = vunpack.c.l.b16 %v1072
    %v1125 = vunpack.c.h.b16 %v1072
    %v1126 = vpack.c.b16 %v1096, %v1094
    %v1127 = vpack.c.b16 %v1097, %v1095
    %v1128 = vpack.c.b16 %v1100, %v1098
    %v1129 = vpack.c.b16 %v1101, %v1099
    %v1130 = vpack.c.b16 %v1104, %v1102
    %v1131 = vpack.c.b16 %v1105, %v1103
    %v1132 = vpack.c.b16 %v1108, %v1106
    %v1133 = vpack.c.b16 %v1109, %v1107
    %v1134 = vpack.c.b16 %v1112, %v1110
    %v1135 = vpack.c.b16 %v1113, %v1111
    %v1136 = vpack.c.b16 %v1116, %v1114
    %v1137 = vpack.c.b16 %v1117, %v1115
    %v1138 = vpack.c.b16 %v1120, %v1118
    %v1139 = vpack.c.b16 %v1121, %v1119
    %v1140 = vpack.c.b16 %v1124, %v1122
    %v1141 = vpack.c.b16 %v1125, %v1123
    %1158 = vmatpush.bf16.msra.mxu0 %v1140
    %1159 = vmatpush.bf16.msra.mxu0 %v1138
    %1160 = vmatpush.bf16.msra.mxu0 %v1136
    %1161 = vmatpush.bf16.msra.mxu0 %v1134
    %1162 = vmatpush.bf16.msra.mxu0 %v1132
    %1163 = vmatpush.bf16.msra.mxu0 %v1130
    %1164 = vmatpush.bf16.msra.mxu0 %v1128
    %1165 = vmatpush.bf16.msra.mxu0 %v1126
    %1166 = vmatmul.bf16.gmra.mxu0 %v1055
    %v1167 = vpop.f32.mrf.mxu0
    %v1168 = vadd.f32 %v1074, %v1167
    %v1169 = vpop.f32.mrf.mxu0
    %1170 = vdwg.mxu0
    %1171 = vmatpush.bf16.msra.mxu0 %v1141
    %1172 = vmatpush.bf16.msra.mxu0 %v1139
    %1173 = vmatpush.bf16.msra.mxu0 %v1137
    %1174 = vmatpush.bf16.msra.mxu0 %v1135
    %1175 = vmatpush.bf16.msra.mxu0 %v1133
    %1176 = vmatpush.bf16.msra.mxu0 %v1131
    %1177 = vmatpush.bf16.msra.mxu0 %v1129
    %1178 = vmatpush.bf16.msra.mxu0 %v1127
    %1179 = vmatmul.bf16.gmra.mxu0 %v1055
    %v1180 = vpop.f32.mrf.mxu0
    %v1181 = vadd.f32 %v1075, %v1180
    %v1182 = vpop.f32.mrf.mxu0
    %1183 = vdwg.mxu0
    %v1184 = vadd.f32 %v1168, %v1181
    %1185 = vadd.xlane.f32.xlu0 %v1184
    %v1186 = vpop.xlane.xlu0 %1185
    %v1187 = vmul.f32 %v1168, %v1168
    %v1188 = vmul.f32 %v1181, %v1181
    %v1189 = vadd.f32 %v1187, %v1188
    %1190 = vadd.xlane.f32.xlu0 %v1189
    %v1191 = vpop.xlane.xlu0 %1190
    %v1192 = vmul.f32 %v1186, 0.00390625
    %v1193 = vmul.f32 %v1191, 0.00390625
    %v1194 = vmul.f32 %v1192, %v1192
    %v1195 = vsub.f32 %v1193, %v1194
    %v1196 = vmax.f32 %v1195, 0.0
    %v1197 = vsub.f32 %v1168, %v1192
    %v1198 = vsub.f32 %v1181, %v1192
    %v1199 = vadd.f32 %v1196, 1e-05
    %v1200 = vrsqrt.pop %v1199
    %v1201 = vmul.f32 %v1200, %v1199
    %v1202 = vmul.f32 %v1201, %v1200
    %v1203 = vmul.f32 0.5, %v1202
    %v1204 = vsub.f32 1.5, %v1203
    %v1205 = vmul.f32 %v1200, %v1204
    %vm1206 = vweird.f32 %v1199
    %vm1207 = vweird.f32 %v1200
    %vm1208 = vmor %vm1206, %vm1207
    %v1209 = vsel %vm1208, %v1200, %v1205
    %v1210 = vmul.f32 %v1197, %v1209
    %v1211 = vmul.f32 %v1198, %v1209
    %v1213 = vperm.slane %v1048, 0
    %v1214 = vperm.slane %v1048, 1
    %v1217 = vmul.f32 %v1210, %v1213
    %v1218 = vmul.f32 %v1211, %v1214
    %v1220 = vperm.slane %v1050, 0
    %v1221 = vperm.slane %v1050, 1
    %v1224 = vadd.f32 %v1217, %v1220
    %v1225 = vadd.f32 %v1218, %v1221
    %v1226 = vmax.f32 %v1224, 0.0
    %v1227 = vmax.f32 %v1225, 0.0
    %v1228 = vpack.c.bf16 %v1226, %v1226
    %v1229 = vpack.c.bf16 %v1227, %v1227
    %s1230 = scalar_lea.vmem [#allocation7], 256
    %v1231 = vld [vmem:[%s1230] sm:$0xf]
    %v1232 = vld [vmem:[%s1230 + $0x4] sm:$0xf]
    %v1233 = vld [vmem:[%s1230 + $0x8] sm:$0xf]
    %v1234 = vld [vmem:[%s1230 + $0xc] sm:$0xf]
    %v1235 = vld [vmem:[%s1230 + $0x10] sm:$0xf]
    %v1236 = vld [vmem:[%s1230 + $0x14] sm:$0xf]
    %v1237 = vld [vmem:[%s1230 + $0x18] sm:$0xf]
    %v1238 = vld [vmem:[%s1230 + $0x1c] sm:$0xf]
    %v1239 = vld [vmem:[%s1230 + $0x20] sm:$0xf]
    %v1240 = vld [vmem:[%s1230 + $0x24] sm:$0xf]
    %v1241 = vld [vmem:[%s1230 + $0x28] sm:$0xf]
    %v1242 = vld [vmem:[%s1230 + $0x2c] sm:$0xf]
    %v1243 = vld [vmem:[%s1230 + $0x30] sm:$0xf]
    %v1244 = vld [vmem:[%s1230 + $0x34] sm:$0xf]
    %v1245 = vld [vmem:[%s1230 + $0x38] sm:$0xf]
    %v1246 = vld [vmem:[%s1230 + $0x3c] sm:$0xf]
    %v1247 = vld [vmem:[%s1230 + $0x40] sm:$0xf]
    %v1248 = vld [vmem:[%s1230 + $0x44] sm:$0xf]
    %v1249 = vld [vmem:[%s1230 + $0x48] sm:$0xf]
    %v1250 = vld [vmem:[%s1230 + $0x4c] sm:$0xf]
    %v1251 = vld [vmem:[%s1230 + $0x50] sm:$0xf]
    %v1252 = vld [vmem:[%s1230 + $0x54] sm:$0xf]
    %v1253 = vld [vmem:[%s1230 + $0x58] sm:$0xf]
    %v1254 = vld [vmem:[%s1230 + $0x5c] sm:$0xf]
    %v1255 = vld [vmem:[%s1230 + $0x60] sm:$0xf]
    %v1256 = vld [vmem:[%s1230 + $0x64] sm:$0xf]
    %v1257 = vld [vmem:[%s1230 + $0x68] sm:$0xf]
    %v1258 = vld [vmem:[%s1230 + $0x6c] sm:$0xf]
    %v1259 = vld [vmem:[%s1230 + $0x70] sm:$0xf]
    %v1260 = vld [vmem:[%s1230 + $0x74] sm:$0xf]
    %v1261 = vld [vmem:[%s1230 + $0x78] sm:$0xf]
    %v1262 = vld [vmem:[%s1230 + $0x7c] sm:$0xf]
    %v1263 = vperm.slane %v1051, 0
    %v1296 = vunpack.c.l.b16 %v1231
    %v1297 = vunpack.c.l.b16 %v1232
    %v1298 = vunpack.c.l.b16 %v1233
    %v1299 = vunpack.c.l.b16 %v1234
    %v1300 = vunpack.c.l.b16 %v1235
    %v1301 = vunpack.c.l.b16 %v1236
    %v1302 = vunpack.c.l.b16 %v1237
    %v1303 = vunpack.c.l.b16 %v1238
    %v1304 = vunpack.c.l.b16 %v1239
    %v1305 = vunpack.c.l.b16 %v1240
    %v1306 = vunpack.c.l.b16 %v1241
    %v1307 = vunpack.c.l.b16 %v1242
    %v1308 = vunpack.c.l.b16 %v1243
    %v1309 = vunpack.c.l.b16 %v1244
    %v1310 = vunpack.c.l.b16 %v1245
    %v1311 = vunpack.c.l.b16 %v1246
    %v1312 = vunpack.c.l.b16 %v1247
    %v1313 = vunpack.c.l.b16 %v1248
    %v1314 = vunpack.c.l.b16 %v1249
    %v1315 = vunpack.c.l.b16 %v1250
    %v1316 = vunpack.c.l.b16 %v1251
    %v1317 = vunpack.c.l.b16 %v1252
    %v1318 = vunpack.c.l.b16 %v1253
    %v1319 = vunpack.c.l.b16 %v1254
    %v1320 = vunpack.c.l.b16 %v1255
    %v1321 = vunpack.c.l.b16 %v1256
    %v1322 = vunpack.c.l.b16 %v1257
    %v1323 = vunpack.c.l.b16 %v1258
    %v1324 = vunpack.c.l.b16 %v1259
    %v1325 = vunpack.c.l.b16 %v1260
    %v1326 = vunpack.c.l.b16 %v1261
    %v1327 = vunpack.c.l.b16 %v1262
    %v1328 = vpack.c.b16 %v1297, %v1296
    %v1329 = vpack.c.b16 %v1299, %v1298
    %v1330 = vpack.c.b16 %v1301, %v1300
    %v1331 = vpack.c.b16 %v1303, %v1302
    %v1332 = vpack.c.b16 %v1305, %v1304
    %v1333 = vpack.c.b16 %v1307, %v1306
    %v1334 = vpack.c.b16 %v1309, %v1308
    %v1335 = vpack.c.b16 %v1311, %v1310
    %v1336 = vpack.c.b16 %v1313, %v1312
    %v1337 = vpack.c.b16 %v1315, %v1314
    %v1338 = vpack.c.b16 %v1317, %v1316
    %v1339 = vpack.c.b16 %v1319, %v1318
    %v1340 = vpack.c.b16 %v1321, %v1320
    %v1341 = vpack.c.b16 %v1323, %v1322
    %v1342 = vpack.c.b16 %v1325, %v1324
    %v1343 = vpack.c.b16 %v1327, %v1326
    %1360 = vmatpush.bf16.msra.mxu0 %v1335
    %1361 = vmatpush.bf16.msra.mxu0 %v1334
    %1362 = vmatpush.bf16.msra.mxu0 %v1333
    %1363 = vmatpush.bf16.msra.mxu0 %v1332
    %1364 = vmatpush.bf16.msra.mxu0 %v1331
    %1365 = vmatpush.bf16.msra.mxu0 %v1330
    %1366 = vmatpush.bf16.msra.mxu0 %v1329
    %1367 = vmatpush.bf16.msra.mxu0 %v1328
    %1368 = vmatmul.bf16.gmra.mxu0 %v1228
    %v1369 = vpop.f32.mrf.mxu0
    %v1370 = vadd.f32 %v1263, %v1369
    %v1371 = vpop.f32.mrf.mxu0
    %1372 = vdwg.mxu0
    %1373 = vmatpush.bf16.msra.mxu0 %v1343
    %1374 = vmatpush.bf16.msra.mxu0 %v1342
    %1375 = vmatpush.bf16.msra.mxu0 %v1341
    %1376 = vmatpush.bf16.msra.mxu0 %v1340
    %1377 = vmatpush.bf16.msra.mxu0 %v1339
    %1378 = vmatpush.bf16.msra.mxu0 %v1338
    %1379 = vmatpush.bf16.msra.mxu0 %v1337
    %1380 = vmatpush.bf16.msra.mxu0 %v1336
    %1381 = vmatmul.bf16.gmra.mxu0 %v1229
    %v1382 = vpop.f32.mrf.mxu0
    %v1383 = vadd.f32 %v1370, %v1382
    %v1384 = vpop.f32.mrf.mxu0
    %1385 = vdwg.mxu0
    %1386 = vadd.xlane.f32.xlu0 %v1383
    %v1387 = vpop.xlane.xlu0 %1386
    %v1388 = vmul.f32 %v1383, %v1383
    %1389 = vadd.xlane.f32.xlu0 %v1388
    %v1390 = vpop.xlane.xlu0 %1389
    %v1391 = vmul.f32 %v1387, 0.0078125
    %v1392 = vmul.f32 %v1390, 0.0078125
    %v1393 = vmul.f32 %v1391, %v1391
    %v1394 = vsub.f32 %v1392, %v1393
    %v1395 = vmax.f32 %v1394, 0.0
    %v1396 = vsub.f32 %v1383, %v1391
    %v1397 = vadd.f32 %v1395, 1e-05
    %v1398 = vrsqrt.pop %v1397
    %v1399 = vmul.f32 %v1398, %v1397
    %v1400 = vmul.f32 %v1399, %v1398
    %v1401 = vmul.f32 0.5, %v1400
    %v1402 = vsub.f32 1.5, %v1401
    %v1403 = vmul.f32 %v1398, %v1402
    %vm1404 = vweird.f32 %v1397
    %vm1405 = vweird.f32 %v1398
    %vm1406 = vmor %vm1404, %vm1405
    %v1407 = vsel %vm1406, %v1398, %v1403
    %v1408 = vmul.f32 %v1396, %v1407
    %v1409 = vperm.slane %v1052, 0
    %v1410 = vmul.f32 %v1408, %v1409
    %v1411 = vperm.slane %v1053, 0
    %v1412 = vadd.f32 %v1410, %v1411
    %v1413 = vadd.f32 %v1412, %v1044
    %v1414 = vld [vmem:[#allocation8] sm:$0xff]
    %v1415 = vld [vmem:[#allocation8 + $0x8] sm:$0xff]
    %v1416 = vld [vmem:[#allocation8 + $0x10] sm:$0xff]
    %v1417 = vld [vmem:[#allocation8 + $0x18] sm:$0xff]
    %v1418 = vld [vmem:[#allocation8 + $0x20] sm:$0xff]
    %v1419 = vld [vmem:[#allocation8 + $0x28] sm:$0xff]
    %v1420 = vld [vmem:[#allocation8 + $0x30] sm:$0xff]
    %v1421 = vld [vmem:[#allocation8 + $0x38] sm:$0xff]
    %v1422 = vld [vmem:[#allocation8 + $0x40] sm:$0xff]
    %v1423 = vld [vmem:[#allocation8 + $0x48] sm:$0xff]
    %v1424 = vld [vmem:[#allocation8 + $0x50] sm:$0xff]
    %v1425 = vld [vmem:[#allocation8 + $0x58] sm:$0xff]
    %v1426 = vld [vmem:[#allocation8 + $0x60] sm:$0xff]
    %v1427 = vld [vmem:[#allocation8 + $0x68] sm:$0xff]
    %v1428 = vld [vmem:[#allocation8 + $0x70] sm:$0xff]
    %v1429 = vld [vmem:[#allocation8 + $0x78] sm:$0xff]
    %v1430 = vperm.slane %v128, 0
    %1431 = vmatpush.msra.mxu0 %v1429
    %1432 = vmatpush.msra.mxu0 %v1428
    %1433 = vmatpush.msra.mxu0 %v1427
    %1434 = vmatpush.msra.mxu0 %v1426
    %1435 = vmatpush.msra.mxu0 %v1425
    %1436 = vmatpush.msra.mxu0 %v1424
    %1437 = vmatpush.msra.mxu0 %v1423
    %1438 = vmatpush.msra.mxu0 %v1422
    %1439 = vmatpush.msra.mxu0 %v1421
    %1440 = vmatpush.msra.mxu0 %v1420
    %1441 = vmatpush.msra.mxu0 %v1419
    %1442 = vmatpush.msra.mxu0 %v1418
    %1443 = vmatpush.msra.mxu0 %v1417
    %1444 = vmatpush.msra.mxu0 %v1416
    %1445 = vmatpush.msra.mxu0 %v1415
    %1446 = vmatpush.msra.mxu0 %v1414
    %1447 = vmatmul.f32.gmra.mxu0 %v1413
    %v1448 = vpop.f32.mrf.mxu0
    %v1449 = vadd.f32 %v1430, %v1448
    %1450 = vdwg.mxu0
    %1451 = vst [vmem:[#allocation13] sm:$0xff] %v1449
    // Predicated region
    $region58: #{tpu_custom_call.1} parent=1 // pred_check
      _
    $region59: #{tpu_custom_call.1} parent=1 // pred_check_branch
      %1453 = sbr.rel (0) target = $region61
    $region60: #{tpu_custom_call.1} parent=1 // pred_region
      %1455 = vsyncadd [#allocation4], 0
      %s1457 = sshll.u32 [#allocation13], 4
      %s1458 = int_to_ptr.vmem [resolvable:$true] %s1457
      %s1459 = sshll.u32 %s8, 4
      %s1460 = int_to_ptr.hbm [resolvable:$true] %s1459
      %1462 = dma.vmem_to_hbm [thread:$0]  %s1458, 128, %s1460, [#allocation4]
    $region61: #{tpu_custom_call.1} parent=1 // pred_fallthru
      _
    // Predicated region
    $region62: #{tpu_custom_call.1} parent=1 // pred_check
      _
    $region63: #{tpu_custom_call.1} parent=1 // pred_check_branch
      %1464 = sbr.rel (0) target = $region65
    $region64: #{tpu_custom_call.1} parent=1 // pred_region
      %1466 = dma.done [#allocation4], 128
    $region65: #{tpu_custom_call.1} parent=1 // pred_fallthru
      _
    %1467 = vsyncpa [#allocation3], 1
    %1468 = vsyncpa [#allocation6], 1
    %1469 = vsyncpa [#allocation9], 1
    %1470 = vsyncpa [#allocation12], 1
    %1471 = vsyncpa [#allocation4], 1

</llo_original>
